<compile_context>
chip_gen: v5e
topology: v5e:2x2
jax: 0.10.0
libtpu: 0.0.40
codegen_flags: <defaults>
</compile_context>

<pallas_src>
import jax
import jax.numpy as jnp
from jax.experimental import pallas as pl
from jax.experimental.pallas import tpu as pltpu

NUM_CLASSES = 2
_VMEM_LIMIT = 48 * 1024 * 1024


def _round_up(x, m):
    return ((x + m - 1) // m) * m


def _pick_tile(n, candidates):
    for c in candidates:
        if n % c == 0:
            return c
    return n


# --------------------------------------------------------------------------
# Fused Conv2d(1,C,(3,H),pad=(1,0)) + LSTM input projection.
# Time-major: x is (Lp+2, Bp, H) (resident in VMEM, fetched once), output is
# gates (Lp, Bp, 4Hd).  Per grid step (one chunk of tl timesteps):
#   conv  = sum_t  x[l+t] @ W_tap[t]            (f32 accum, Cp = 128k lanes)
#   gates = (conv + b_conv) @ W_ih^T + (b_ih+b_hh)
# Padded conv channels are exactly zero and the corresponding W_ih rows are
# zero, so downstream math is unaffected.
# --------------------------------------------------------------------------
def conv_proj_kernel(x_ref, wtap_ref, bconv_ref, wih_ref, bgate_ref, g_ref):
    # x_ref: (Lp+2, Bp, H) bf16; wtap_ref: (3, H, Cp) bf16; bconv_ref: (1, Cp)
    # wih_ref: (Cp, 4Hd) bf16; bgate_ref: (1, 4Hd); g_ref: (tl, Bp, 4Hd) f32
    tl, Bp, G4 = g_ref.shape
    H = x_ref.shape[-1]
    Cp = wtap_ref.shape[-1]
    base = pl.multiple_of(pl.program_id(0) * tl, tl)

    acc = jnp.zeros((tl * Bp, Cp), jnp.float32)
    for t in range(3):                                   # 3 conv taps
        # leading-dim slab slice: no sublane-unaligned loads
        xt = x_ref[pl.ds(base + t, tl)].reshape(tl * Bp, H)
        acc = acc + jnp.dot(xt, wtap_ref[t], preferred_element_type=jnp.float32)

    conv = (acc + bconv_ref[...]).astype(wih_ref.dtype)  # (tl*Bp, Cp) bf16
    gates = jnp.dot(conv, wih_ref[...], preferred_element_type=jnp.float32)
    gates = gates + bgate_ref[...]
    g_ref[...] = gates.reshape(tl, Bp, G4).astype(g_ref.dtype)


def conv_proj_forward(x_pad_tm, w_taps, b_conv_p, wih_p, b_gate, *, tl):
    """x_pad_tm: (Lp+2, Bp, H) bf16 -> time-major gates (Lp, Bp, 4Hd) f32."""
    Lp2, Bp, H = x_pad_tm.shape
    Lp = Lp2 - 2
    Cp, G4 = wih_p.shape
    return pl.pallas_call(
        conv_proj_kernel,
        out_shape=jax.ShapeDtypeStruct((Lp, Bp, G4), jnp.float32),
        grid=(Lp // tl,),
        in_specs=[pl.BlockSpec((Lp2, Bp, H), lambda l: (0, 0, 0)),   # resident
                  pl.BlockSpec((3, H, Cp), lambda l: (0, 0, 0)),
                  pl.BlockSpec((1, Cp), lambda l: (0, 0)),
                  pl.BlockSpec((Cp, G4), lambda l: (0, 0)),
                  pl.BlockSpec((1, G4), lambda l: (0, 0))],
        out_specs=pl.BlockSpec((tl, Bp, G4), lambda l: (l, 0, 0)),
        compiler_params=pltpu.CompilerParams(
            dimension_semantics=("parallel",),
            vmem_limit_bytes=_VMEM_LIMIT),
    )(x_pad_tm, w_taps, b_conv_p, wih_p, b_gate)


# --------------------------------------------------------------------------
# Fused LSTM recurrence + classifier (time-major).
# gates_x = x @ W_ih^T + b is precomputed by the conv kernel; the recurrence
# only carries h @ W_hh^T.  Grid = (batch tiles, time chunks); a chunk of tl
# timesteps runs per grid step with a static unroll; h / c persist in f32
# VMEM scratch across chunks.  Per-step h is stashed into a (tl, tb, Hd)
# scratch and one (tl*tb, Hd)@(Hd, Ncp) classifier matmul + a single
# lane-dense block store happen per chunk.  PyTorch gate order: i, f, g, o.
# --------------------------------------------------------------------------
def lstm_cls_kernel(gx_ref, whh_ref, wcls_ref, bcls_ref, o_ref,
                    h_sc, c_sc, hs_sc):
    t_idx = pl.program_id(1)

    @pl.when(t_idx == 0)
    def _():
        h_sc[...] = jnp.zeros_like(h_sc)
        c_sc[...] = jnp.zeros_like(c_sc)

    tl, tb, _ = gx_ref.shape
    Hd = h_sc.shape[-1]
    for j in range(tl):                                   # static unroll
        gates = gx_ref[j] + jnp.dot(                      # contiguous (tb,4Hd)
            h_sc[...].astype(whh_ref.dtype), whh_ref[...],
            preferred_element_type=jnp.float32)
        i_g = jax.nn.sigmoid(gates[:, 0:Hd])
        f_g = jax.nn.sigmoid(gates[:, Hd:2 * Hd])
        g_g = jnp.tanh(gates[:, 2 * Hd:3 * Hd])
        o_g = jax.nn.sigmoid(gates[:, 3 * Hd:4 * Hd])
        c_new = f_g * c_sc[...] + i_g * g_g
        h_new = o_g * jnp.tanh(c_new)
        c_sc[...] = c_new
        h_sc[...] = h_new
        hs_sc[j] = h_new

    hs = hs_sc[...].reshape(tl * tb, Hd).astype(wcls_ref.dtype)
    logits = jnp.dot(hs, wcls_ref[...],
                     preferred_element_type=jnp.float32) + bcls_ref[...]
    o_ref[...] = logits.reshape(tl, tb, o_ref.shape[-1]).astype(o_ref.dtype)


def lstm_classifier_forward(gates_tm, w_hh, w_cls_p, b_cls_p, *, tb, tl):
    """gates_tm: (Lp, Bp, 4Hd) f32 -> time-major logits (Lp, Bp, Ncp) f32."""
    Lp, Bp, G4 = gates_tm.shape
    Hd = w_hh.shape[1]
    Ncp = w_cls_p.shape[1]
    whh_t = jnp.transpose(w_hh).astype(jnp.bfloat16)      # (Hd, 4Hd)

    return pl.pallas_call(
        lstm_cls_kernel,
        out_shape=jax.ShapeDtypeStruct((Lp, Bp, Ncp), jnp.float32),
        grid=(Bp // tb, Lp // tl),
        in_specs=[pl.BlockSpec((tl, tb, G4), lambda b, t: (t, b, 0)),
                  pl.BlockSpec((Hd, G4), lambda b, t: (0, 0)),
                  pl.BlockSpec((Hd, Ncp), lambda b, t: (0, 0)),
                  pl.BlockSpec((1, Ncp), lambda b, t: (0, 0))],
        out_specs=pl.BlockSpec((tl, tb, Ncp), lambda b, t: (t, b, 0)),
        scratch_shapes=[pltpu.VMEM((tb, Hd), jnp.float32),       # h state
                        pltpu.VMEM((tb, Hd), jnp.float32),       # c state
                        pltpu.VMEM((tl, tb, Hd), jnp.float32)],  # per-chunk h
        compiler_params=pltpu.CompilerParams(
            dimension_semantics=("parallel", "arbitrary"),
            vmem_limit_bytes=_VMEM_LIMIT),
    )(gates_tm, whh_t, w_cls_p, b_cls_p)


# --------------------------------------------------------------------------
# Parameter init (deterministic, xavier_uniform on weights as in init_weights)
# --------------------------------------------------------------------------
def xavier_uniform(key, shape, fan_in, fan_out):
    bound = (6.0 / (fan_in + fan_out)) ** 0.5
    return jax.random.uniform(key, shape, jnp.float32, -bound, bound)


def init_params(key, hidden_size, cnn_out_channels, lstm_hidden, vocab_size):
    H, C, Hd = hidden_size, cnn_out_channels, lstm_hidden
    ks = jax.random.split(key, 9)
    k_conv = 1.0 / (3.0 * H) ** 0.5
    k_lstm = 1.0 / Hd ** 0.5
    return {
        # TODO(synk): pretrained BERT encoder (AutoModel.from_pretrained) has no
        # clean Pallas equivalent here; last_hidden_state is synthesized by a
        # deterministic embedding lookup.
        "embed": 0.02 * jax.random.normal(ks[0], (vocab_size, H), jnp.float32),
        # nn.Conv2d(1, C, kernel_size=(3, H), padding=(1, 0))
        "w_conv": xavier_uniform(ks[1], (C, 1, 3, H), 3 * H, C * 3 * H),
        "b_conv": jax.random.uniform(ks[2], (C,), jnp.float32, -k_conv, k_conv),
        # nn.LSTM(input_size=C, hidden_size=Hd, batch_first=True)
        # (dropout=0.2 with num_layers=1 applies no dropout)
        "w_ih": xavier_uniform(ks[3], (4 * Hd, C), C, 4 * Hd),
        "w_hh": xavier_uniform(ks[4], (4 * Hd, Hd), Hd, 4 * Hd),
        "b_ih": jax.random.uniform(ks[5], (4 * Hd,), jnp.float32, -k_lstm, k_lstm),
        "b_hh": jax.random.uniform(ks[6], (4 * Hd,), jnp.float32, -k_lstm, k_lstm),
        # nn.Linear(Hd, NUM_CLASSES)
        "w_cls": xavier_uniform(ks[7], (NUM_CLASSES, Hd), Hd, NUM_CLASSES),
        "b_cls": jax.random.uniform(ks[8], (NUM_CLASSES,), jnp.float32,
                                    -k_lstm, k_lstm),
    }


# --------------------------------------------------------------------------
# Forward pass (mirrors BERT_2DCNN_LSTM.forward)
# --------------------------------------------------------------------------
def bert_2dcnn_lstm_forward(params, input_ids, attention_mask):
    B, L = input_ids.shape
    H = params["embed"].shape[1]
    C = params["w_conv"].shape[0]
    Hd = params["w_hh"].shape[1]
    G4 = 4 * Hd
    Cp = _round_up(C, 128)
    Ncp = _round_up(NUM_CLASSES, 128)

    # Batch / time padding.  tb fills the MXU (<=128, 2+ tiles/core when big).
    Bp = _round_up(B, 8)
    if Bp > 128:
        Bp = _round_up(B, 128)
        tb = 128
    else:
        tb = Bp
    Lp = _round_up(L, 8)
    tl_lstm = 16 if Lp % 16 == 0 else 8
    tl_conv = _pick_tile(Lp, (64, 32, 16, 8))

    # "BERT" last_hidden_state, built TIME-MAJOR: (L, B, H); attention_mask
    # only affects the encoder output, so apply it to the synthetic embeddings.
    hidden_tm = params["embed"][input_ids.T]
    hidden_tm = hidden_tm * attention_mask.T[..., None].astype(hidden_tm.dtype)
    # 1 front / 1 back conv halo + time padding to Lp + batch padding to Bp.
    x_pad = jnp.pad(hidden_tm,
                    ((1, 1 + Lp - L), (0, Bp - B), (0, 0))).astype(jnp.bfloat16)

    # Conv weights as 3 taps, output channels zero-padded to 128 lanes.
    w_taps = jnp.transpose(params["w_conv"][:, 0, :, :], (1, 2, 0))     # (3,H,C)
    w_taps = jnp.pad(w_taps, ((0, 0), (0, 0), (0, Cp - C))).astype(jnp.bfloat16)
    b_conv_p = jnp.pad(params["b_conv"].astype(jnp.float32),
                       (0, Cp - C)).reshape(1, Cp)
    # LSTM input projection (rows for padded conv channels are zero).
    wih_p = jnp.pad(jnp.transpose(params["w_ih"]),
                    ((0, Cp - C), (0, 0))).astype(jnp.bfloat16)          # (Cp,4Hd)
    b_gate = (params["b_ih"] + params["b_hh"]).astype(jnp.float32).reshape(1, G4)

    # Fused conv + input projection: time-major gates (Lp, Bp, 4Hd).
    gates_tm = conv_proj_forward(x_pad, w_taps, b_conv_p, wih_p, b_gate,
                                 tl=tl_conv)

    # Fused LSTM recurrence + classifier (classifier padded to 128 lanes).
    wcls_p = jnp.pad(jnp.transpose(params["w_cls"]),
                     ((0, 0), (0, Ncp - NUM_CLASSES))).astype(jnp.bfloat16)
    bcls_p = jnp.pad(params["b_cls"].astype(jnp.float32),
                     (0, Ncp - NUM_CLASSES)).reshape(1, Ncp)
    logits_tm = lstm_classifier_forward(gates_tm, params["w_hh"],
                                        wcls_p, bcls_p, tb=tb, tl=tl_lstm)

    # Back to batch-major, drop batch/time/class padding.
    return jnp.transpose(logits_tm[:L, :B, :NUM_CLASSES], (1, 0, 2))


if __name__ == "__main__":
    B, L = 2, 8          # batch, seq length
    H = 32               # bert hidden size (small synthetic)
    C = 16               # cnn_out_channels (small synthetic)
    Hd = 32              # lstm_hidden_size (small synthetic)
    VOCAB = 64

    key = jax.random.PRNGKey(0)
    k_params, k_ids = jax.random.split(key)
    params = init_params(k_params, H, C, Hd, VOCAB)
    input_ids = jax.random.randint(k_ids, (B, L), 0, VOCAB)
    attention_mask = jnp.ones((B, L), jnp.int32)

    fwd = jax.jit(bert_2dcnn_lstm_forward)
    logits = fwd(params, input_ids, attention_mask)
    jax.block_until_ready(logits)
    assert logits.shape == (B, L, NUM_CLASSES)
    print("KERNEL_OK")
</pallas_src>

<mosaic_0001>
module attributes {stable_mosaic.version = 11 : i64} {
  func.func @conv_proj_kernel(%arg0: i32, %arg1: memref<10x8x32xbf16, #tpu.memory_space<vmem>>, %arg2: memref<3x32x128xbf16, #tpu.memory_space<vmem>>, %arg3: memref<1x128xf32, #tpu.memory_space<vmem>>, %arg4: memref<128x128xbf16, #tpu.memory_space<vmem>>, %arg5: memref<1x128xf32, #tpu.memory_space<vmem>>, %arg6: memref<8x8x128xf32, #tpu.memory_space<vmem>>) attributes {dimension_semantics = [#tpu.dimension_semantics<parallel>], iteration_bounds = array<i64: 1>, scalar_prefetch = 0 : i64, scratch_operands = 0 : i64, tpu.core_type = #tpu.core_type<tc>, window_params = [{pipeline_mode = #tpu.pipeline_mode<synchronous>, transform_indices = @transform_0, window_bounds = array<i64: 10, 8, 32>}, {pipeline_mode = #tpu.pipeline_mode<synchronous>, transform_indices = @transform_1, window_bounds = array<i64: 3, 32, 128>}, {pipeline_mode = #tpu.pipeline_mode<synchronous>, transform_indices = @transform_2, window_bounds = array<i64: 1, 128>}, {pipeline_mode = #tpu.pipeline_mode<synchronous>, transform_indices = @transform_3, window_bounds = array<i64: 128, 128>}, {pipeline_mode = #tpu.pipeline_mode<synchronous>, transform_indices = @transform_4, window_bounds = array<i64: 1, 128>}, {transform_indices = @transform_5, window_bounds = array<i64: 8, 8, 128>}]} {
    %c8_i32 = arith.constant 8 : i32
    %0 = arith.muli %arg0, %c8_i32 : i32
    %1 = tpu.assume_multiple %0, 8 : i32
    %cst = arith.constant 0.000000e+00 : f32
    %2 = vector.broadcast %cst : f32 to vector<64x128xf32>
    %c0_i32 = arith.constant 0 : i32
    %3 = arith.addi %1, %c0_i32 : i32
    %4 = arith.index_cast %3 : i32 to index
    %c0 = arith.constant 0 : index
    %c0_0 = arith.constant 0 : index
    %5 = vector.load %arg1[%4, %c0, %c0_0] : memref<10x8x32xbf16, #tpu.memory_space<vmem>>, vector<8x8x32xbf16>
    %6 = vector.shape_cast %5 : vector<8x8x32xbf16> to vector<64x32xbf16>
    %c0_1 = arith.constant 0 : index
    %c0_2 = arith.constant 0 : index
    %c0_3 = arith.constant 0 : index
    %7 = vector.load %arg2[%c0_1, %c0_2, %c0_3] : memref<3x32x128xbf16, #tpu.memory_space<vmem>>, vector<1x32x128xbf16>
    %8 = vector.shape_cast %7 : vector<1x32x128xbf16> to vector<32x128xbf16>
    %cst_4 = arith.constant dense<0.000000e+00> : vector<64x128xf32>
    %9 = tpu.matmul %6, %8, %cst_4 {dimension_numbers = #tpu.dot_dimension_numbers<[1], [0], [0], [1], [0, 0, 1, 1], [], []>} : vector<64x32xbf16>, vector<32x128xbf16>, vector<64x128xf32> -> vector<64x128xf32>
    %10 = arith.addf %2, %9 : vector<64x128xf32>
    %c1_i32 = arith.constant 1 : i32
    %11 = arith.addi %1, %c1_i32 : i32
    %12 = arith.index_cast %11 : i32 to index
    %c0_5 = arith.constant 0 : index
    %c0_6 = arith.constant 0 : index
    %13 = vector.load %arg1[%12, %c0_5, %c0_6] : memref<10x8x32xbf16, #tpu.memory_space<vmem>>, vector<8x8x32xbf16>
    %14 = vector.shape_cast %13 : vector<8x8x32xbf16> to vector<64x32xbf16>
    %c1 = arith.constant 1 : index
    %c0_7 = arith.constant 0 : index
    %c0_8 = arith.constant 0 : index
    %15 = vector.load %arg2[%c1, %c0_7, %c0_8] : memref<3x32x128xbf16, #tpu.memory_space<vmem>>, vector<1x32x128xbf16>
    %16 = vector.shape_cast %15 : vector<1x32x128xbf16> to vector<32x128xbf16>
    %cst_9 = arith.constant dense<0.000000e+00> : vector<64x128xf32>
    %17 = tpu.matmul %14, %16, %cst_9 {dimension_numbers = #tpu.dot_dimension_numbers<[1], [0], [0], [1], [0, 0, 1, 1], [], []>} : vector<64x32xbf16>, vector<32x128xbf16>, vector<64x128xf32> -> vector<64x128xf32>
    %18 = arith.addf %10, %17 : vector<64x128xf32>
    %c2_i32 = arith.constant 2 : i32
    %19 = arith.addi %1, %c2_i32 : i32
    %20 = arith.index_cast %19 : i32 to index
    %c0_10 = arith.constant 0 : index
    %c0_11 = arith.constant 0 : index
    %21 = vector.load %arg1[%20, %c0_10, %c0_11] : memref<10x8x32xbf16, #tpu.memory_space<vmem>>, vector<8x8x32xbf16>
    %22 = vector.shape_cast %21 : vector<8x8x32xbf16> to vector<64x32xbf16>
    %c2 = arith.constant 2 : index
    %c0_12 = arith.constant 0 : index
    %c0_13 = arith.constant 0 : index
    %23 = vector.load %arg2[%c2, %c0_12, %c0_13] : memref<3x32x128xbf16, #tpu.memory_space<vmem>>, vector<1x32x128xbf16>
    %24 = vector.shape_cast %23 : vector<1x32x128xbf16> to vector<32x128xbf16>
    %cst_14 = arith.constant dense<0.000000e+00> : vector<64x128xf32>
    %25 = tpu.matmul %22, %24, %cst_14 {dimension_numbers = #tpu.dot_dimension_numbers<[1], [0], [0], [1], [0, 0, 1, 1], [], []>} : vector<64x32xbf16>, vector<32x128xbf16>, vector<64x128xf32> -> vector<64x128xf32>
    %26 = arith.addf %18, %25 : vector<64x128xf32>
    %c0_15 = arith.constant 0 : index
    %c0_16 = arith.constant 0 : index
    %27 = vector.load %arg3[%c0_15, %c0_16] : memref<1x128xf32, #tpu.memory_space<vmem>>, vector<1x128xf32>
    %28 = vector.broadcast %27 : vector<1x128xf32> to vector<64x128xf32>
    %29 = arith.addf %26, %28 : vector<64x128xf32>
    %30 = arith.truncf %29 : vector<64x128xf32> to vector<64x128xbf16>
    %c0_17 = arith.constant 0 : index
    %c0_18 = arith.constant 0 : index
    %31 = vector.load %arg4[%c0_17, %c0_18] : memref<128x128xbf16, #tpu.memory_space<vmem>>, vector<128x128xbf16>
    %cst_19 = arith.constant dense<0.000000e+00> : vector<64x128xf32>
    %32 = tpu.matmul %30, %31, %cst_19 {dimension_numbers = #tpu.dot_dimension_numbers<[1], [0], [0], [1], [0, 0, 1, 1], [], []>} : vector<64x128xbf16>, vector<128x128xbf16>, vector<64x128xf32> -> vector<64x128xf32>
    %c0_20 = arith.constant 0 : index
    %c0_21 = arith.constant 0 : index
    %33 = vector.load %arg5[%c0_20, %c0_21] : memref<1x128xf32, #tpu.memory_space<vmem>>, vector<1x128xf32>
    %34 = vector.broadcast %33 : vector<1x128xf32> to vector<64x128xf32>
    %35 = arith.addf %32, %34 : vector<64x128xf32>
    %36 = vector.shape_cast %35 : vector<64x128xf32> to vector<8x8x128xf32>
    %c0_22 = arith.constant 0 : index
    %c0_23 = arith.constant 0 : index
    %c0_24 = arith.constant 0 : index
    %37 = vector.load %arg6[%c0_22, %c0_23, %c0_24] : memref<8x8x128xf32, #tpu.memory_space<vmem>>, vector<8x8x128xf32>
    tpu.vector_store %arg6[%c0_22, %c0_23, %c0_24], %36 {strides = array<i32>} : memref<8x8x128xf32, #tpu.memory_space<vmem>>, vector<8x8x128xf32>,
    return
  }
  func.func @transform_0(%arg0: i32) -> (i32, i32, i32) {
    %c0_i32 = arith.constant 0 : i32
    %c0_i32_0 = arith.constant 0 : i32
    %c0_i32_1 = arith.constant 0 : i32
    %c0_i32_2 = arith.constant 0 : i32
    return %c0_i32, %c0_i32_0, %c0_i32_1 : i32, i32, i32
  }
  func.func @transform_1(%arg0: i32) -> (i32, i32, i32) {
    %c0_i32 = arith.constant 0 : i32
    %c0_i32_0 = arith.constant 0 : i32
    %c0_i32_1 = arith.constant 0 : i32
    %c0_i32_2 = arith.constant 0 : i32
    return %c0_i32, %c0_i32_0, %c0_i32_1 : i32, i32, i32
  }
  func.func @transform_2(%arg0: i32) -> (i32, i32) {
    %c0_i32 = arith.constant 0 : i32
    %c0_i32_0 = arith.constant 0 : i32
    %c0_i32_1 = arith.constant 0 : i32
    return %c0_i32, %c0_i32_0 : i32, i32
  }
  func.func @transform_3(%arg0: i32) -> (i32, i32) {
    %c0_i32 = arith.constant 0 : i32
    %c0_i32_0 = arith.constant 0 : i32
    %c0_i32_1 = arith.constant 0 : i32
    return %c0_i32, %c0_i32_0 : i32, i32
  }
  func.func @transform_4(%arg0: i32) -> (i32, i32) {
    %c0_i32 = arith.constant 0 : i32
    %c0_i32_0 = arith.constant 0 : i32
    %c0_i32_1 = arith.constant 0 : i32
    return %c0_i32, %c0_i32_0 : i32, i32
  }
  func.func @transform_5(%arg0: i32) -> (i32, i32, i32) {
    %c0_i32 = arith.constant 0 : i32
    %c0_i32_0 = arith.constant 0 : i32
    %c0_i32_1 = arith.constant 0 : i32
    return %arg0, %c0_i32, %c0_i32_0 : i32, i32, i32
  }
}

module attributes {stable_mosaic.version = 11 : i64} {
  func.func @lstm_cls_kernel(%arg0: i32, %arg1: i32, %arg2: memref<8x8x128xf32, #tpu.memory_space<vmem>>, %arg3: memref<32x128xbf16, #tpu.memory_space<vmem>>, %arg4: memref<32x128xbf16, #tpu.memory_space<vmem>>, %arg5: memref<1x128xf32, #tpu.memory_space<vmem>>, %arg6: memref<8x8x128xf32, #tpu.memory_space<vmem>>, %arg7: memref<8x32xf32, #tpu.memory_space<vmem>>, %arg8: memref<8x32xf32, #tpu.memory_space<vmem>>, %arg9: memref<8x8x32xf32, #tpu.memory_space<vmem>>) attributes {dimension_semantics = [#tpu.dimension_semantics<parallel>, #tpu.dimension_semantics<arbitrary>], iteration_bounds = array<i64: 1, 1>, scalar_prefetch = 0 : i64, scratch_operands = 3 : i64, tpu.core_type = #tpu.core_type<tc>, window_params = [{transform_indices = @transform_0, window_bounds = array<i64: 8, 8, 128>}, {pipeline_mode = #tpu.pipeline_mode<synchronous>, transform_indices = @transform_1, window_bounds = array<i64: 32, 128>}, {pipeline_mode = #tpu.pipeline_mode<synchronous>, transform_indices = @transform_2, window_bounds = array<i64: 32, 128>}, {pipeline_mode = #tpu.pipeline_mode<synchronous>, transform_indices = @transform_3, window_bounds = array<i64: 1, 128>}, {transform_indices = @transform_4, window_bounds = array<i64: 8, 8, 128>}]} {
    %c0_i32 = arith.constant 0 : i32
    %0 = arith.cmpi eq, %arg1, %c0_i32 : i32
    %1 = arith.extui %0 : i1 to i32
    %c0_i32_0 = arith.constant 0 : i32
    %2 = arith.cmpi ne, %1, %c0_i32_0 : i32
    scf.if %2 {
      %cst_163 = arith.constant 0.000000e+00 : f32
      %317 = vector.broadcast %cst_163 : f32 to vector<8x32xf32>
      %c0_164 = arith.constant 0 : index
      %c0_165 = arith.constant 0 : index
      %318 = vector.load %arg7[%c0_164, %c0_165] : memref<8x32xf32, #tpu.memory_space<vmem>>, vector<8x32xf32>
      tpu.vector_store %arg7[%c0_164, %c0_165], %317 {strides = array<i32>} : memref<8x32xf32, #tpu.memory_space<vmem>>, vector<8x32xf32>,
      %cst_166 = arith.constant 0.000000e+00 : f32
      %319 = vector.broadcast %cst_166 : f32 to vector<8x32xf32>
      %c0_167 = arith.constant 0 : index
      %c0_168 = arith.constant 0 : index
      %320 = vector.load %arg8[%c0_167, %c0_168] : memref<8x32xf32, #tpu.memory_space<vmem>>, vector<8x32xf32>
      tpu.vector_store %arg8[%c0_167, %c0_168], %319 {strides = array<i32>} : memref<8x32xf32, #tpu.memory_space<vmem>>, vector<8x32xf32>,
    } else {
    }
    %c0 = arith.constant 0 : index
    %c0_1 = arith.constant 0 : index
    %c0_2 = arith.constant 0 : index
    %3 = vector.load %arg2[%c0, %c0_1, %c0_2] : memref<8x8x128xf32, #tpu.memory_space<vmem>>, vector<1x8x128xf32>
    %4 = vector.shape_cast %3 : vector<1x8x128xf32> to vector<8x128xf32>
    %c0_3 = arith.constant 0 : index
    %c0_4 = arith.constant 0 : index
    %5 = vector.load %arg7[%c0_3, %c0_4] : memref<8x32xf32, #tpu.memory_space<vmem>>, vector<8x32xf32>
    %6 = arith.truncf %5 : vector<8x32xf32> to vector<8x32xbf16>
    %c0_5 = arith.constant 0 : index
    %c0_6 = arith.constant 0 : index
    %7 = vector.load %arg3[%c0_5, %c0_6] : memref<32x128xbf16, #tpu.memory_space<vmem>>, vector<32x128xbf16>
    %cst = arith.constant dense<0.000000e+00> : vector<8x128xf32>
    %8 = tpu.matmul %6, %7, %cst {dimension_numbers = #tpu.dot_dimension_numbers<[1], [0], [0], [1], [0, 0, 1, 1], [], []>} : vector<8x32xbf16>, vector<32x128xbf16>, vector<8x128xf32> -> vector<8x128xf32>
    %9 = arith.addf %4, %8 : vector<8x128xf32>
    %10 = vector.extract_strided_slice %9 {offsets = [0, 0], sizes = [8, 32], strides = [1, 1]} : vector<8x128xf32> to vector<8x32xf32>
    %11 = arith.negf %10 : vector<8x32xf32>
    %12 = math.exp %11 : vector<8x32xf32>
    %cst_7 = arith.constant 1.000000e+00 : f32
    %13 = vector.broadcast %cst_7 : f32 to vector<8x32xf32>
    %14 = arith.addf %13, %12 : vector<8x32xf32>
    %15 = arith.divf %13, %14 : vector<8x32xf32>
    %16 = vector.extract_strided_slice %9 {offsets = [0, 32], sizes = [8, 32], strides = [1, 1]} : vector<8x128xf32> to vector<8x32xf32>
    %17 = arith.negf %16 : vector<8x32xf32>
    %18 = math.exp %17 : vector<8x32xf32>
    %cst_8 = arith.constant 1.000000e+00 : f32
    %19 = vector.broadcast %cst_8 : f32 to vector<8x32xf32>
    %20 = arith.addf %19, %18 : vector<8x32xf32>
    %21 = arith.divf %19, %20 : vector<8x32xf32>
    %22 = vector.extract_strided_slice %9 {offsets = [0, 64], sizes = [8, 32], strides = [1, 1]} : vector<8x128xf32> to vector<8x32xf32>
    %23 = math.tanh %22 : vector<8x32xf32>
    %24 = vector.extract_strided_slice %9 {offsets = [0, 96], sizes = [8, 32], strides = [1, 1]} : vector<8x128xf32> to vector<8x32xf32>
    %25 = arith.negf %24 : vector<8x32xf32>
    %26 = math.exp %25 : vector<8x32xf32>
    %cst_9 = arith.constant 1.000000e+00 : f32
    %27 = vector.broadcast %cst_9 : f32 to vector<8x32xf32>
    %28 = arith.addf %27, %26 : vector<8x32xf32>
    %29 = arith.divf %27, %28 : vector<8x32xf32>
    %c0_10 = arith.constant 0 : index
    %c0_11 = arith.constant 0 : index
    %30 = vector.load %arg8[%c0_10, %c0_11] : memref<8x32xf32, #tpu.memory_space<vmem>>, vector<8x32xf32>
    %31 = arith.mulf %21, %30 : vector<8x32xf32>
    %32 = arith.mulf %15, %23 : vector<8x32xf32>
    %33 = arith.addf %31, %32 : vector<8x32xf32>
    %34 = math.tanh %33 : vector<8x32xf32>
    %35 = arith.mulf %29, %34 : vector<8x32xf32>
    %c0_12 = arith.constant 0 : index
    %c0_13 = arith.constant 0 : index
    %36 = vector.load %arg8[%c0_12, %c0_13] : memref<8x32xf32, #tpu.memory_space<vmem>>, vector<8x32xf32>
    tpu.vector_store %arg8[%c0_12, %c0_13], %33 {strides = array<i32>} : memref<8x32xf32, #tpu.memory_space<vmem>>, vector<8x32xf32>,
    %c0_14 = arith.constant 0 : index
    %c0_15 = arith.constant 0 : index
    %37 = vector.load %arg7[%c0_14, %c0_15] : memref<8x32xf32, #tpu.memory_space<vmem>>, vector<8x32xf32>
    tpu.vector_store %arg7[%c0_14, %c0_15], %35 {strides = array<i32>} : memref<8x32xf32, #tpu.memory_space<vmem>>, vector<8x32xf32>,
    %c0_16 = arith.constant 0 : index
    %c0_17 = arith.constant 0 : index
    %c0_18 = arith.constant 0 : index
    %38 = vector.load %arg9[%c0_16, %c0_17, %c0_18] : memref<8x8x32xf32, #tpu.memory_space<vmem>>, vector<1x8x32xf32>
    %39 = vector.shape_cast %38 : vector<1x8x32xf32> to vector<8x32xf32>
    %40 = vector.shape_cast %35 : vector<8x32xf32> to vector<1x8x32xf32>
    tpu.vector_store %arg9[%c0_16, %c0_17, %c0_18], %40 {strides = array<i32>} : memref<8x8x32xf32, #tpu.memory_space<vmem>>, vector<1x8x32xf32>,
    %c1 = arith.constant 1 : index
    %c0_19 = arith.constant 0 : index
    %c0_20 = arith.constant 0 : index
    %41 = vector.load %arg2[%c1, %c0_19, %c0_20] : memref<8x8x128xf32, #tpu.memory_space<vmem>>, vector<1x8x128xf32>
    %42 = vector.shape_cast %41 : vector<1x8x128xf32> to vector<8x128xf32>
    %c0_21 = arith.constant 0 : index
    %c0_22 = arith.constant 0 : index
    %43 = vector.load %arg7[%c0_21, %c0_22] : memref<8x32xf32, #tpu.memory_space<vmem>>, vector<8x32xf32>
    %44 = arith.truncf %43 : vector<8x32xf32> to vector<8x32xbf16>
    %c0_23 = arith.constant 0 : index
    %c0_24 = arith.constant 0 : index
    %45 = vector.load %arg3[%c0_23, %c0_24] : memref<32x128xbf16, #tpu.memory_space<vmem>>, vector<32x128xbf16>
    %cst_25 = arith.constant dense<0.000000e+00> : vector<8x128xf32>
    %46 = tpu.matmul %44, %45, %cst_25 {dimension_numbers = #tpu.dot_dimension_numbers<[1], [0], [0], [1], [0, 0, 1, 1], [], []>} : vector<8x32xbf16>, vector<32x128xbf16>, vector<8x128xf32> -> vector<8x128xf32>
    %47 = arith.addf %42, %46 : vector<8x128xf32>
    %48 = vector.extract_strided_slice %47 {offsets = [0, 0], sizes = [8, 32], strides = [1, 1]} : vector<8x128xf32> to vector<8x32xf32>
    %49 = arith.negf %48 : vector<8x32xf32>
    %50 = math.exp %49 : vector<8x32xf32>
    %cst_26 = arith.constant 1.000000e+00 : f32
    %51 = vector.broadcast %cst_26 : f32 to vector<8x32xf32>
    %52 = arith.addf %51, %50 : vector<8x32xf32>
    %53 = arith.divf %51, %52 : vector<8x32xf32>
    %54 = vector.extract_strided_slice %47 {offsets = [0, 32], sizes = [8, 32], strides = [1, 1]} : vector<8x128xf32> to vector<8x32xf32>
    %55 = arith.negf %54 : vector<8x32xf32>
    %56 = math.exp %55 : vector<8x32xf32>
    %cst_27 = arith.constant 1.000000e+00 : f32
    %57 = vector.broadcast %cst_27 : f32 to vector<8x32xf32>
    %58 = arith.addf %57, %56 : vector<8x32xf32>
    %59 = arith.divf %57, %58 : vector<8x32xf32>
    %60 = vector.extract_strided_slice %47 {offsets = [0, 64], sizes = [8, 32], strides = [1, 1]} : vector<8x128xf32> to vector<8x32xf32>
    %61 = math.tanh %60 : vector<8x32xf32>
    %62 = vector.extract_strided_slice %47 {offsets = [0, 96], sizes = [8, 32], strides = [1, 1]} : vector<8x128xf32> to vector<8x32xf32>
    %63 = arith.negf %62 : vector<8x32xf32>
    %64 = math.exp %63 : vector<8x32xf32>
    %cst_28 = arith.constant 1.000000e+00 : f32
    %65 = vector.broadcast %cst_28 : f32 to vector<8x32xf32>
    %66 = arith.addf %65, %64 : vector<8x32xf32>
    %67 = arith.divf %65, %66 : vector<8x32xf32>
    %c0_29 = arith.constant 0 : index
    %c0_30 = arith.constant 0 : index
    %68 = vector.load %arg8[%c0_29, %c0_30] : memref<8x32xf32, #tpu.memory_space<vmem>>, vector<8x32xf32>
    %69 = arith.mulf %59, %68 : vector<8x32xf32>
    %70 = arith.mulf %53, %61 : vector<8x32xf32>
    %71 = arith.addf %69, %70 : vector<8x32xf32>
    %72 = math.tanh %71 : vector<8x32xf32>
    %73 = arith.mulf %67, %72 : vector<8x32xf32>
    %c0_31 = arith.constant 0 : index
    %c0_32 = arith.constant 0 : index
    %74 = vector.load %arg8[%c0_31, %c0_32] : memref<8x32xf32, #tpu.memory_space<vmem>>, vector<8x32xf32>
    tpu.vector_store %arg8[%c0_31, %c0_32], %71 {strides = array<i32>} : memref<8x32xf32, #tpu.memory_space<vmem>>, vector<8x32xf32>,
    %c0_33 = arith.constant 0 : index
    %c0_34 = arith.constant 0 : index
    %75 = vector.load %arg7[%c0_33, %c0_34] : memref<8x32xf32, #tpu.memory_space<vmem>>, vector<8x32xf32>
    tpu.vector_store %arg7[%c0_33, %c0_34], %73 {strides = array<i32>} : memref<8x32xf32, #tpu.memory_space<vmem>>, vector<8x32xf32>,
    %c1_35 = arith.constant 1 : index
    %c0_36 = arith.constant 0 : index
    %c0_37 = arith.constant 0 : index
    %76 = vector.load %arg9[%c1_35, %c0_36, %c0_37] : memref<8x8x32xf32, #tpu.memory_space<vmem>>, vector<1x8x32xf32>
    %77 = vector.shape_cast %76 : vector<1x8x32xf32> to vector<8x32xf32>
    %78 = vector.shape_cast %73 : vector<8x32xf32> to vector<1x8x32xf32>
    tpu.vector_store %arg9[%c1_35, %c0_36, %c0_37], %78 {strides = array<i32>} : memref<8x8x32xf32, #tpu.memory_space<vmem>>, vector<1x8x32xf32>,
    %c2 = arith.constant 2 : index
    %c0_38 = arith.constant 0 : index
    %c0_39 = arith.constant 0 : index
    %79 = vector.load %arg2[%c2, %c0_38, %c0_39] : memref<8x8x128xf32, #tpu.memory_space<vmem>>, vector<1x8x128xf32>
    %80 = vector.shape_cast %79 : vector<1x8x128xf32> to vector<8x128xf32>
    %c0_40 = arith.constant 0 : index
    %c0_41 = arith.constant 0 : index
    %81 = vector.load %arg7[%c0_40, %c0_41] : memref<8x32xf32, #tpu.memory_space<vmem>>, vector<8x32xf32>
    %82 = arith.truncf %81 : vector<8x32xf32> to vector<8x32xbf16>
    %c0_42 = arith.constant 0 : index
    %c0_43 = arith.constant 0 : index
    %83 = vector.load %arg3[%c0_42, %c0_43] : memref<32x128xbf16, #tpu.memory_space<vmem>>, vector<32x128xbf16>
    %cst_44 = arith.constant dense<0.000000e+00> : vector<8x128xf32>
    %84 = tpu.matmul %82, %83, %cst_44 {dimension_numbers = #tpu.dot_dimension_numbers<[1], [0], [0], [1], [0, 0, 1, 1], [], []>} : vector<8x32xbf16>, vector<32x128xbf16>, vector<8x128xf32> -> vector<8x128xf32>
    %85 = arith.addf %80, %84 : vector<8x128xf32>
    %86 = vector.extract_strided_slice %85 {offsets = [0, 0], sizes = [8, 32], strides = [1, 1]} : vector<8x128xf32> to vector<8x32xf32>
    %87 = arith.negf %86 : vector<8x32xf32>
    %88 = math.exp %87 : vector<8x32xf32>
    %cst_45 = arith.constant 1.000000e+00 : f32
    %89 = vector.broadcast %cst_45 : f32 to vector<8x32xf32>
    %90 = arith.addf %89, %88 : vector<8x32xf32>
    %91 = arith.divf %89, %90 : vector<8x32xf32>
    %92 = vector.extract_strided_slice %85 {offsets = [0, 32], sizes = [8, 32], strides = [1, 1]} : vector<8x128xf32> to vector<8x32xf32>
    %93 = arith.negf %92 : vector<8x32xf32>
    %94 = math.exp %93 : vector<8x32xf32>
    %cst_46 = arith.constant 1.000000e+00 : f32
    %95 = vector.broadcast %cst_46 : f32 to vector<8x32xf32>
    %96 = arith.addf %95, %94 : vector<8x32xf32>
    %97 = arith.divf %95, %96 : vector<8x32xf32>
    %98 = vector.extract_strided_slice %85 {offsets = [0, 64], sizes = [8, 32], strides = [1, 1]} : vector<8x128xf32> to vector<8x32xf32>
    %99 = math.tanh %98 : vector<8x32xf32>
    %100 = vector.extract_strided_slice %85 {offsets = [0, 96], sizes = [8, 32], strides = [1, 1]} : vector<8x128xf32> to vector<8x32xf32>
    %101 = arith.negf %100 : vector<8x32xf32>
    %102 = math.exp %101 : vector<8x32xf32>
    %cst_47 = arith.constant 1.000000e+00 : f32
    %103 = vector.broadcast %cst_47 : f32 to vector<8x32xf32>
    %104 = arith.addf %103, %102 : vector<8x32xf32>
    %105 = arith.divf %103, %104 : vector<8x32xf32>
    %c0_48 = arith.constant 0 : index
    %c0_49 = arith.constant 0 : index
    %106 = vector.load %arg8[%c0_48, %c0_49] : memref<8x32xf32, #tpu.memory_space<vmem>>, vector<8x32xf32>
    %107 = arith.mulf %97, %106 : vector<8x32xf32>
    %108 = arith.mulf %91, %99 : vector<8x32xf32>
    %109 = arith.addf %107, %108 : vector<8x32xf32>
    %110 = math.tanh %109 : vector<8x32xf32>
    %111 = arith.mulf %105, %110 : vector<8x32xf32>
    %c0_50 = arith.constant 0 : index
    %c0_51 = arith.constant 0 : index
    %112 = vector.load %arg8[%c0_50, %c0_51] : memref<8x32xf32, #tpu.memory_space<vmem>>, vector<8x32xf32>
    tpu.vector_store %arg8[%c0_50, %c0_51], %109 {strides = array<i32>} : memref<8x32xf32, #tpu.memory_space<vmem>>, vector<8x32xf32>,
    %c0_52 = arith.constant 0 : index
    %c0_53 = arith.constant 0 : index
    %113 = vector.load %arg7[%c0_52, %c0_53] : memref<8x32xf32, #tpu.memory_space<vmem>>, vector<8x32xf32>
    tpu.vector_store %arg7[%c0_52, %c0_53], %111 {strides = array<i32>} : memref<8x32xf32, #tpu.memory_space<vmem>>, vector<8x32xf32>,
    %c2_54 = arith.constant 2 : index
    %c0_55 = arith.constant 0 : index
    %c0_56 = arith.constant 0 : index
    %114 = vector.load %arg9[%c2_54, %c0_55, %c0_56] : memref<8x8x32xf32, #tpu.memory_space<vmem>>, vector<1x8x32xf32>
    %115 = vector.shape_cast %114 : vector<1x8x32xf32> to vector<8x32xf32>
    %116 = vector.shape_cast %111 : vector<8x32xf32> to vector<1x8x32xf32>
    tpu.vector_store %arg9[%c2_54, %c0_55, %c0_56], %116 {strides = array<i32>} : memref<8x8x32xf32, #tpu.memory_space<vmem>>, vector<1x8x32xf32>,
    %c3 = arith.constant 3 : index
    %c0_57 = arith.constant 0 : index
    %c0_58 = arith.constant 0 : index
    %117 = vector.load %arg2[%c3, %c0_57, %c0_58] : memref<8x8x128xf32, #tpu.memory_space<vmem>>, vector<1x8x128xf32>
    %118 = vector.shape_cast %117 : vector<1x8x128xf32> to vector<8x128xf32>
    %c0_59 = arith.constant 0 : index
    %c0_60 = arith.constant 0 : index
    %119 = vector.load %arg7[%c0_59, %c0_60] : memref<8x32xf32, #tpu.memory_space<vmem>>, vector<8x32xf32>
    %120 = arith.truncf %119 : vector<8x32xf32> to vector<8x32xbf16>
    %c0_61 = arith.constant 0 : index
    %c0_62 = arith.constant 0 : index
    %121 = vector.load %arg3[%c0_61, %c0_62] : memref<32x128xbf16, #tpu.memory_space<vmem>>, vector<32x128xbf16>
    %cst_63 = arith.constant dense<0.000000e+00> : vector<8x128xf32>
    %122 = tpu.matmul %120, %121, %cst_63 {dimension_numbers = #tpu.dot_dimension_numbers<[1], [0], [0], [1], [0, 0, 1, 1], [], []>} : vector<8x32xbf16>, vector<32x128xbf16>, vector<8x128xf32> -> vector<8x128xf32>
    %123 = arith.addf %118, %122 : vector<8x128xf32>
    %124 = vector.extract_strided_slice %123 {offsets = [0, 0], sizes = [8, 32], strides = [1, 1]} : vector<8x128xf32> to vector<8x32xf32>
    %125 = arith.negf %124 : vector<8x32xf32>
    %126 = math.exp %125 : vector<8x32xf32>
    %cst_64 = arith.constant 1.000000e+00 : f32
    %127 = vector.broadcast %cst_64 : f32 to vector<8x32xf32>
    %128 = arith.addf %127, %126 : vector<8x32xf32>
    %129 = arith.divf %127, %128 : vector<8x32xf32>
    %130 = vector.extract_strided_slice %123 {offsets = [0, 32], sizes = [8, 32], strides = [1, 1]} : vector<8x128xf32> to vector<8x32xf32>
    %131 = arith.negf %130 : vector<8x32xf32>
    %132 = math.exp %131 : vector<8x32xf32>
    %cst_65 = arith.constant 1.000000e+00 : f32
    %133 = vector.broadcast %cst_65 : f32 to vector<8x32xf32>
    %134 = arith.addf %133, %132 : vector<8x32xf32>
    %135 = arith.divf %133, %134 : vector<8x32xf32>
    %136 = vector.extract_strided_slice %123 {offsets = [0, 64], sizes = [8, 32], strides = [1, 1]} : vector<8x128xf32> to vector<8x32xf32>
    %137 = math.tanh %136 : vector<8x32xf32>
    %138 = vector.extract_strided_slice %123 {offsets = [0, 96], sizes = [8, 32], strides = [1, 1]} : vector<8x128xf32> to vector<8x32xf32>
    %139 = arith.negf %138 : vector<8x32xf32>
    %140 = math.exp %139 : vector<8x32xf32>
    %cst_66 = arith.constant 1.000000e+00 : f32
    %141 = vector.broadcast %cst_66 : f32 to vector<8x32xf32>
    %142 = arith.addf %141, %140 : vector<8x32xf32>
    %143 = arith.divf %141, %142 : vector<8x32xf32>
    %c0_67 = arith.constant 0 : index
    %c0_68 = arith.constant 0 : index
    %144 = vector.load %arg8[%c0_67, %c0_68] : memref<8x32xf32, #tpu.memory_space<vmem>>, vector<8x32xf32>
    %145 = arith.mulf %135, %144 : vector<8x32xf32>
    %146 = arith.mulf %129, %137 : vector<8x32xf32>
    %147 = arith.addf %145, %146 : vector<8x32xf32>
    %148 = math.tanh %147 : vector<8x32xf32>
    %149 = arith.mulf %143, %148 : vector<8x32xf32>
    %c0_69 = arith.constant 0 : index
    %c0_70 = arith.constant 0 : index
    %150 = vector.load %arg8[%c0_69, %c0_70] : memref<8x32xf32, #tpu.memory_space<vmem>>, vector<8x32xf32>
    tpu.vector_store %arg8[%c0_69, %c0_70], %147 {strides = array<i32>} : memref<8x32xf32, #tpu.memory_space<vmem>>, vector<8x32xf32>,
    %c0_71 = arith.constant 0 : index
    %c0_72 = arith.constant 0 : index
    %151 = vector.load %arg7[%c0_71, %c0_72] : memref<8x32xf32, #tpu.memory_space<vmem>>, vector<8x32xf32>
    tpu.vector_store %arg7[%c0_71, %c0_72], %149 {strides = array<i32>} : memref<8x32xf32, #tpu.memory_space<vmem>>, vector<8x32xf32>,
    %c3_73 = arith.constant 3 : index
    %c0_74 = arith.constant 0 : index
    %c0_75 = arith.constant 0 : index
    %152 = vector.load %arg9[%c3_73, %c0_74, %c0_75] : memref<8x8x32xf32, #tpu.memory_space<vmem>>, vector<1x8x32xf32>
    %153 = vector.shape_cast %152 : vector<1x8x32xf32> to vector<8x32xf32>
    %154 = vector.shape_cast %149 : vector<8x32xf32> to vector<1x8x32xf32>
    tpu.vector_store %arg9[%c3_73, %c0_74, %c0_75], %154 {strides = array<i32>} : memref<8x8x32xf32, #tpu.memory_space<vmem>>, vector<1x8x32xf32>,
    %c4 = arith.constant 4 : index
    %c0_76 = arith.constant 0 : index
    %c0_77 = arith.constant 0 : index
    %155 = vector.load %arg2[%c4, %c0_76, %c0_77] : memref<8x8x128xf32, #tpu.memory_space<vmem>>, vector<1x8x128xf32>
    %156 = vector.shape_cast %155 : vector<1x8x128xf32> to vector<8x128xf32>
    %c0_78 = arith.constant 0 : index
    %c0_79 = arith.constant 0 : index
    %157 = vector.load %arg7[%c0_78, %c0_79] : memref<8x32xf32, #tpu.memory_space<vmem>>, vector<8x32xf32>
    %158 = arith.truncf %157 : vector<8x32xf32> to vector<8x32xbf16>
    %c0_80 = arith.constant 0 : index
    %c0_81 = arith.constant 0 : index
    %159 = vector.load %arg3[%c0_80, %c0_81] : memref<32x128xbf16, #tpu.memory_space<vmem>>, vector<32x128xbf16>
    %cst_82 = arith.constant dense<0.000000e+00> : vector<8x128xf32>
    %160 = tpu.matmul %158, %159, %cst_82 {dimension_numbers = #tpu.dot_dimension_numbers<[1], [0], [0], [1], [0, 0, 1, 1], [], []>} : vector<8x32xbf16>, vector<32x128xbf16>, vector<8x128xf32> -> vector<8x128xf32>
    %161 = arith.addf %156, %160 : vector<8x128xf32>
    %162 = vector.extract_strided_slice %161 {offsets = [0, 0], sizes = [8, 32], strides = [1, 1]} : vector<8x128xf32> to vector<8x32xf32>
    %163 = arith.negf %162 : vector<8x32xf32>
    %164 = math.exp %163 : vector<8x32xf32>
    %cst_83 = arith.constant 1.000000e+00 : f32
    %165 = vector.broadcast %cst_83 : f32 to vector<8x32xf32>
    %166 = arith.addf %165, %164 : vector<8x32xf32>
    %167 = arith.divf %165, %166 : vector<8x32xf32>
    %168 = vector.extract_strided_slice %161 {offsets = [0, 32], sizes = [8, 32], strides = [1, 1]} : vector<8x128xf32> to vector<8x32xf32>
    %169 = arith.negf %168 : vector<8x32xf32>
    %170 = math.exp %169 : vector<8x32xf32>
    %cst_84 = arith.constant 1.000000e+00 : f32
    %171 = vector.broadcast %cst_84 : f32 to vector<8x32xf32>
    %172 = arith.addf %171, %170 : vector<8x32xf32>
    %173 = arith.divf %171, %172 : vector<8x32xf32>
    %174 = vector.extract_strided_slice %161 {offsets = [0, 64], sizes = [8, 32], strides = [1, 1]} : vector<8x128xf32> to vector<8x32xf32>
    %175 = math.tanh %174 : vector<8x32xf32>
    %176 = vector.extract_strided_slice %161 {offsets = [0, 96], sizes = [8, 32], strides = [1, 1]} : vector<8x128xf32> to vector<8x32xf32>
    %177 = arith.negf %176 : vector<8x32xf32>
    %178 = math.exp %177 : vector<8x32xf32>
    %cst_85 = arith.constant 1.000000e+00 : f32
    %179 = vector.broadcast %cst_85 : f32 to vector<8x32xf32>
    %180 = arith.addf %179, %178 : vector<8x32xf32>
    %181 = arith.divf %179, %180 : vector<8x32xf32>
    %c0_86 = arith.constant 0 : index
    %c0_87 = arith.constant 0 : index
    %182 = vector.load %arg8[%c0_86, %c0_87] : memref<8x32xf32, #tpu.memory_space<vmem>>, vector<8x32xf32>
    %183 = arith.mulf %173, %182 : vector<8x32xf32>
    %184 = arith.mulf %167, %175 : vector<8x32xf32>
    %185 = arith.addf %183, %184 : vector<8x32xf32>
    %186 = math.tanh %185 : vector<8x32xf32>
    %187 = arith.mulf %181, %186 : vector<8x32xf32>
    %c0_88 = arith.constant 0 : index
    %c0_89 = arith.constant 0 : index
    %188 = vector.load %arg8[%c0_88, %c0_89] : memref<8x32xf32, #tpu.memory_space<vmem>>, vector<8x32xf32>
    tpu.vector_store %arg8[%c0_88, %c0_89], %185 {strides = array<i32>} : memref<8x32xf32, #tpu.memory_space<vmem>>, vector<8x32xf32>,
    %c0_90 = arith.constant 0 : index
    %c0_91 = arith.constant 0 : index
    %189 = vector.load %arg7[%c0_90, %c0_91] : memref<8x32xf32, #tpu.memory_space<vmem>>, vector<8x32xf32>
    tpu.vector_store %arg7[%c0_90, %c0_91], %187 {strides = array<i32>} : memref<8x32xf32, #tpu.memory_space<vmem>>, vector<8x32xf32>,
    %c4_92 = arith.constant 4 : index
    %c0_93 = arith.constant 0 : index
    %c0_94 = arith.constant 0 : index
    %190 = vector.load %arg9[%c4_92, %c0_93, %c0_94] : memref<8x8x32xf32, #tpu.memory_space<vmem>>, vector<1x8x32xf32>
    %191 = vector.shape_cast %190 : vector<1x8x32xf32> to vector<8x32xf32>
    %192 = vector.shape_cast %187 : vector<8x32xf32> to vector<1x8x32xf32>
    tpu.vector_store %arg9[%c4_92, %c0_93, %c0_94], %192 {strides = array<i32>} : memref<8x8x32xf32, #tpu.memory_space<vmem>>, vector<1x8x32xf32>,
    %c5 = arith.constant 5 : index
    %c0_95 = arith.constant 0 : index
    %c0_96 = arith.constant 0 : index
    %193 = vector.load %arg2[%c5, %c0_95, %c0_96] : memref<8x8x128xf32, #tpu.memory_space<vmem>>, vector<1x8x128xf32>
    %194 = vector.shape_cast %193 : vector<1x8x128xf32> to vector<8x128xf32>
    %c0_97 = arith.constant 0 : index
    %c0_98 = arith.constant 0 : index
    %195 = vector.load %arg7[%c0_97, %c0_98] : memref<8x32xf32, #tpu.memory_space<vmem>>, vector<8x32xf32>
    %196 = arith.truncf %195 : vector<8x32xf32> to vector<8x32xbf16>
    %c0_99 = arith.constant 0 : index
    %c0_100 = arith.constant 0 : index
    %197 = vector.load %arg3[%c0_99, %c0_100] : memref<32x128xbf16, #tpu.memory_space<vmem>>, vector<32x128xbf16>
    %cst_101 = arith.constant dense<0.000000e+00> : vector<8x128xf32>
    %198 = tpu.matmul %196, %197, %cst_101 {dimension_numbers = #tpu.dot_dimension_numbers<[1], [0], [0], [1], [0, 0, 1, 1], [], []>} : vector<8x32xbf16>, vector<32x128xbf16>, vector<8x128xf32> -> vector<8x128xf32>
    %199 = arith.addf %194, %198 : vector<8x128xf32>
    %200 = vector.extract_strided_slice %199 {offsets = [0, 0], sizes = [8, 32], strides = [1, 1]} : vector<8x128xf32> to vector<8x32xf32>
    %201 = arith.negf %200 : vector<8x32xf32>
    %202 = math.exp %201 : vector<8x32xf32>
    %cst_102 = arith.constant 1.000000e+00 : f32
    %203 = vector.broadcast %cst_102 : f32 to vector<8x32xf32>
    %204 = arith.addf %203, %202 : vector<8x32xf32>
    %205 = arith.divf %203, %204 : vector<8x32xf32>
    %206 = vector.extract_strided_slice %199 {offsets = [0, 32], sizes = [8, 32], strides = [1, 1]} : vector<8x128xf32> to vector<8x32xf32>
    %207 = arith.negf %206 : vector<8x32xf32>
    %208 = math.exp %207 : vector<8x32xf32>
    %cst_103 = arith.constant 1.000000e+00 : f32
    %209 = vector.broadcast %cst_103 : f32 to vector<8x32xf32>
    %210 = arith.addf %209, %208 : vector<8x32xf32>
    %211 = arith.divf %209, %210 : vector<8x32xf32>
    %212 = vector.extract_strided_slice %199 {offsets = [0, 64], sizes = [8, 32], strides = [1, 1]} : vector<8x128xf32> to vector<8x32xf32>
    %213 = math.tanh %212 : vector<8x32xf32>
    %214 = vector.extract_strided_slice %199 {offsets = [0, 96], sizes = [8, 32], strides = [1, 1]} : vector<8x128xf32> to vector<8x32xf32>
    %215 = arith.negf %214 : vector<8x32xf32>
    %216 = math.exp %215 : vector<8x32xf32>
    %cst_104 = arith.constant 1.000000e+00 : f32
    %217 = vector.broadcast %cst_104 : f32 to vector<8x32xf32>
    %218 = arith.addf %217, %216 : vector<8x32xf32>
    %219 = arith.divf %217, %218 : vector<8x32xf32>
    %c0_105 = arith.constant 0 : index
    %c0_106 = arith.constant 0 : index
    %220 = vector.load %arg8[%c0_105, %c0_106] : memref<8x32xf32, #tpu.memory_space<vmem>>, vector<8x32xf32>
    %221 = arith.mulf %211, %220 : vector<8x32xf32>
    %222 = arith.mulf %205, %213 : vector<8x32xf32>
    %223 = arith.addf %221, %222 : vector<8x32xf32>
    %224 = math.tanh %223 : vector<8x32xf32>
    %225 = arith.mulf %219, %224 : vector<8x32xf32>
    %c0_107 = arith.constant 0 : index
    %c0_108 = arith.constant 0 : index
    %226 = vector.load %arg8[%c0_107, %c0_108] : memref<8x32xf32, #tpu.memory_space<vmem>>, vector<8x32xf32>
    tpu.vector_store %arg8[%c0_107, %c0_108], %223 {strides = array<i32>} : memref<8x32xf32, #tpu.memory_space<vmem>>, vector<8x32xf32>,
    %c0_109 = arith.constant 0 : index
    %c0_110 = arith.constant 0 : index
    %227 = vector.load %arg7[%c0_109, %c0_110] : memref<8x32xf32, #tpu.memory_space<vmem>>, vector<8x32xf32>
    tpu.vector_store %arg7[%c0_109, %c0_110], %225 {strides = array<i32>} : memref<8x32xf32, #tpu.memory_space<vmem>>, vector<8x32xf32>,
    %c5_111 = arith.constant 5 : index
    %c0_112 = arith.constant 0 : index
    %c0_113 = arith.constant 0 : index
    %228 = vector.load %arg9[%c5_111, %c0_112, %c0_113] : memref<8x8x32xf32, #tpu.memory_space<vmem>>, vector<1x8x32xf32>
    %229 = vector.shape_cast %228 : vector<1x8x32xf32> to vector<8x32xf32>
    %230 = vector.shape_cast %225 : vector<8x32xf32> to vector<1x8x32xf32>
    tpu.vector_store %arg9[%c5_111, %c0_112, %c0_113], %230 {strides = array<i32>} : memref<8x8x32xf32, #tpu.memory_space<vmem>>, vector<1x8x32xf32>,
    %c6 = arith.constant 6 : index
    %c0_114 = arith.constant 0 : index
    %c0_115 = arith.constant 0 : index
    %231 = vector.load %arg2[%c6, %c0_114, %c0_115] : memref<8x8x128xf32, #tpu.memory_space<vmem>>, vector<1x8x128xf32>
    %232 = vector.shape_cast %231 : vector<1x8x128xf32> to vector<8x128xf32>
    %c0_116 = arith.constant 0 : index
    %c0_117 = arith.constant 0 : index
    %233 = vector.load %arg7[%c0_116, %c0_117] : memref<8x32xf32, #tpu.memory_space<vmem>>, vector<8x32xf32>
    %234 = arith.truncf %233 : vector<8x32xf32> to vector<8x32xbf16>
    %c0_118 = arith.constant 0 : index
    %c0_119 = arith.constant 0 : index
    %235 = vector.load %arg3[%c0_118, %c0_119] : memref<32x128xbf16, #tpu.memory_space<vmem>>, vector<32x128xbf16>
    %cst_120 = arith.constant dense<0.000000e+00> : vector<8x128xf32>
    %236 = tpu.matmul %234, %235, %cst_120 {dimension_numbers = #tpu.dot_dimension_numbers<[1], [0], [0], [1], [0, 0, 1, 1], [], []>} : vector<8x32xbf16>, vector<32x128xbf16>, vector<8x128xf32> -> vector<8x128xf32>
    %237 = arith.addf %232, %236 : vector<8x128xf32>
    %238 = vector.extract_strided_slice %237 {offsets = [0, 0], sizes = [8, 32], strides = [1, 1]} : vector<8x128xf32> to vector<8x32xf32>
    %239 = arith.negf %238 : vector<8x32xf32>
    %240 = math.exp %239 : vector<8x32xf32>
    %cst_121 = arith.constant 1.000000e+00 : f32
    %241 = vector.broadcast %cst_121 : f32 to vector<8x32xf32>
    %242 = arith.addf %241, %240 : vector<8x32xf32>
    %243 = arith.divf %241, %242 : vector<8x32xf32>
    %244 = vector.extract_strided_slice %237 {offsets = [0, 32], sizes = [8, 32], strides = [1, 1]} : vector<8x128xf32> to vector<8x32xf32>
    %245 = arith.negf %244 : vector<8x32xf32>
    %246 = math.exp %245 : vector<8x32xf32>
    %cst_122 = arith.constant 1.000000e+00 : f32
    %247 = vector.broadcast %cst_122 : f32 to vector<8x32xf32>
    %248 = arith.addf %247, %246 : vector<8x32xf32>
    %249 = arith.divf %247, %248 : vector<8x32xf32>
    %250 = vector.extract_strided_slice %237 {offsets = [0, 64], sizes = [8, 32], strides = [1, 1]} : vector<8x128xf32> to vector<8x32xf32>
    %251 = math.tanh %250 : vector<8x32xf32>
    %252 = vector.extract_strided_slice %237 {offsets = [0, 96], sizes = [8, 32], strides = [1, 1]} : vector<8x128xf32> to vector<8x32xf32>
    %253 = arith.negf %252 : vector<8x32xf32>
    %254 = math.exp %253 : vector<8x32xf32>
    %cst_123 = arith.constant 1.000000e+00 : f32
    %255 = vector.broadcast %cst_123 : f32 to vector<8x32xf32>
    %256 = arith.addf %255, %254 : vector<8x32xf32>
    %257 = arith.divf %255, %256 : vector<8x32xf32>
    %c0_124 = arith.constant 0 : index
    %c0_125 = arith.constant 0 : index
    %258 = vector.load %arg8[%c0_124, %c0_125] : memref<8x32xf32, #tpu.memory_space<vmem>>, vector<8x32xf32>
    %259 = arith.mulf %249, %258 : vector<8x32xf32>
    %260 = arith.mulf %243, %251 : vector<8x32xf32>
    %261 = arith.addf %259, %260 : vector<8x32xf32>
    %262 = math.tanh %261 : vector<8x32xf32>
    %263 = arith.mulf %257, %262 : vector<8x32xf32>
    %c0_126 = arith.constant 0 : index
    %c0_127 = arith.constant 0 : index
    %264 = vector.load %arg8[%c0_126, %c0_127] : memref<8x32xf32, #tpu.memory_space<vmem>>, vector<8x32xf32>
    tpu.vector_store %arg8[%c0_126, %c0_127], %261 {strides = array<i32>} : memref<8x32xf32, #tpu.memory_space<vmem>>, vector<8x32xf32>,
    %c0_128 = arith.constant 0 : index
    %c0_129 = arith.constant 0 : index
    %265 = vector.load %arg7[%c0_128, %c0_129] : memref<8x32xf32, #tpu.memory_space<vmem>>, vector<8x32xf32>
    tpu.vector_store %arg7[%c0_128, %c0_129], %263 {strides = array<i32>} : memref<8x32xf32, #tpu.memory_space<vmem>>, vector<8x32xf32>,
    %c6_130 = arith.constant 6 : index
    %c0_131 = arith.constant 0 : index
    %c0_132 = arith.constant 0 : index
    %266 = vector.load %arg9[%c6_130, %c0_131, %c0_132] : memref<8x8x32xf32, #tpu.memory_space<vmem>>, vector<1x8x32xf32>
    %267 = vector.shape_cast %266 : vector<1x8x32xf32> to vector<8x32xf32>
    %268 = vector.shape_cast %263 : vector<8x32xf32> to vector<1x8x32xf32>
    tpu.vector_store %arg9[%c6_130, %c0_131, %c0_132], %268 {strides = array<i32>} : memref<8x8x32xf32, #tpu.memory_space<vmem>>, vector<1x8x32xf32>,
    %c7 = arith.constant 7 : index
    %c0_133 = arith.constant 0 : index
    %c0_134 = arith.constant 0 : index
    %269 = vector.load %arg2[%c7, %c0_133, %c0_134] : memref<8x8x128xf32, #tpu.memory_space<vmem>>, vector<1x8x128xf32>
    %270 = vector.shape_cast %269 : vector<1x8x128xf32> to vector<8x128xf32>
    %c0_135 = arith.constant 0 : index
    %c0_136 = arith.constant 0 : index
    %271 = vector.load %arg7[%c0_135, %c0_136] : memref<8x32xf32, #tpu.memory_space<vmem>>, vector<8x32xf32>
    %272 = arith.truncf %271 : vector<8x32xf32> to vector<8x32xbf16>
    %c0_137 = arith.constant 0 : index
    %c0_138 = arith.constant 0 : index
    %273 = vector.load %arg3[%c0_137, %c0_138] : memref<32x128xbf16, #tpu.memory_space<vmem>>, vector<32x128xbf16>
    %cst_139 = arith.constant dense<0.000000e+00> : vector<8x128xf32>
    %274 = tpu.matmul %272, %273, %cst_139 {dimension_numbers = #tpu.dot_dimension_numbers<[1], [0], [0], [1], [0, 0, 1, 1], [], []>} : vector<8x32xbf16>, vector<32x128xbf16>, vector<8x128xf32> -> vector<8x128xf32>
    %275 = arith.addf %270, %274 : vector<8x128xf32>
    %276 = vector.extract_strided_slice %275 {offsets = [0, 0], sizes = [8, 32], strides = [1, 1]} : vector<8x128xf32> to vector<8x32xf32>
    %277 = arith.negf %276 : vector<8x32xf32>
    %278 = math.exp %277 : vector<8x32xf32>
    %cst_140 = arith.constant 1.000000e+00 : f32
    %279 = vector.broadcast %cst_140 : f32 to vector<8x32xf32>
    %280 = arith.addf %279, %278 : vector<8x32xf32>
    %281 = arith.divf %279, %280 : vector<8x32xf32>
    %282 = vector.extract_strided_slice %275 {offsets = [0, 32], sizes = [8, 32], strides = [1, 1]} : vector<8x128xf32> to vector<8x32xf32>
    %283 = arith.negf %282 : vector<8x32xf32>
    %284 = math.exp %283 : vector<8x32xf32>
    %cst_141 = arith.constant 1.000000e+00 : f32
    %285 = vector.broadcast %cst_141 : f32 to vector<8x32xf32>
    %286 = arith.addf %285, %284 : vector<8x32xf32>
    %287 = arith.divf %285, %286 : vector<8x32xf32>
    %288 = vector.extract_strided_slice %275 {offsets = [0, 64], sizes = [8, 32], strides = [1, 1]} : vector<8x128xf32> to vector<8x32xf32>
    %289 = math.tanh %288 : vector<8x32xf32>
    %290 = vector.extract_strided_slice %275 {offsets = [0, 96], sizes = [8, 32], strides = [1, 1]} : vector<8x128xf32> to vector<8x32xf32>
    %291 = arith.negf %290 : vector<8x32xf32>
    %292 = math.exp %291 : vector<8x32xf32>
    %cst_142 = arith.constant 1.000000e+00 : f32
    %293 = vector.broadcast %cst_142 : f32 to vector<8x32xf32>
    %294 = arith.addf %293, %292 : vector<8x32xf32>
    %295 = arith.divf %293, %294 : vector<8x32xf32>
    %c0_143 = arith.constant 0 : index
    %c0_144 = arith.constant 0 : index
    %296 = vector.load %arg8[%c0_143, %c0_144] : memref<8x32xf32, #tpu.memory_space<vmem>>, vector<8x32xf32>
    %297 = arith.mulf %287, %296 : vector<8x32xf32>
    %298 = arith.mulf %281, %289 : vector<8x32xf32>
    %299 = arith.addf %297, %298 : vector<8x32xf32>
    %300 = math.tanh %299 : vector<8x32xf32>
    %301 = arith.mulf %295, %300 : vector<8x32xf32>
    %c0_145 = arith.constant 0 : index
    %c0_146 = arith.constant 0 : index
    %302 = vector.load %arg8[%c0_145, %c0_146] : memref<8x32xf32, #tpu.memory_space<vmem>>, vector<8x32xf32>
    tpu.vector_store %arg8[%c0_145, %c0_146], %299 {strides = array<i32>} : memref<8x32xf32, #tpu.memory_space<vmem>>, vector<8x32xf32>,
    %c0_147 = arith.constant 0 : index
    %c0_148 = arith.constant 0 : index
    %303 = vector.load %arg7[%c0_147, %c0_148] : memref<8x32xf32, #tpu.memory_space<vmem>>, vector<8x32xf32>
    tpu.vector_store %arg7[%c0_147, %c0_148], %301 {strides = array<i32>} : memref<8x32xf32, #tpu.memory_space<vmem>>, vector<8x32xf32>,
    %c7_149 = arith.constant 7 : index
    %c0_150 = arith.constant 0 : index
    %c0_151 = arith.constant 0 : index
    %304 = vector.load %arg9[%c7_149, %c0_150, %c0_151] : memref<8x8x32xf32, #tpu.memory_space<vmem>>, vector<1x8x32xf32>
    %305 = vector.shape_cast %304 : vector<1x8x32xf32> to vector<8x32xf32>
    %306 = vector.shape_cast %301 : vector<8x32xf32> to vector<1x8x32xf32>
    tpu.vector_store %arg9[%c7_149, %c0_150, %c0_151], %306 {strides = array<i32>} : memref<8x8x32xf32, #tpu.memory_space<vmem>>, vector<1x8x32xf32>,
    %c0_152 = arith.constant 0 : index
    %c0_153 = arith.constant 0 : index
    %c0_154 = arith.constant 0 : index
    %307 = vector.load %arg9[%c0_152, %c0_153, %c0_154] : memref<8x8x32xf32, #tpu.memory_space<vmem>>, vector<8x8x32xf32>
    %308 = vector.shape_cast %307 : vector<8x8x32xf32> to vector<64x32xf32>
    %309 = arith.truncf %308 : vector<64x32xf32> to vector<64x32xbf16>
    %c0_155 = arith.constant 0 : index
    %c0_156 = arith.constant 0 : index
    %310 = vector.load %arg4[%c0_155, %c0_156] : memref<32x128xbf16, #tpu.memory_space<vmem>>, vector<32x128xbf16>
    %cst_157 = arith.constant dense<0.000000e+00> : vector<64x128xf32>
    %311 = tpu.matmul %309, %310, %cst_157 {dimension_numbers = #tpu.dot_dimension_numbers<[1], [0], [0], [1], [0, 0, 1, 1], [], []>} : vector<64x32xbf16>, vector<32x128xbf16>, vector<64x128xf32> -> vector<64x128xf32>
    %c0_158 = arith.constant 0 : index
    %c0_159 = arith.constant 0 : index
    %312 = vector.load %arg5[%c0_158, %c0_159] : memref<1x128xf32, #tpu.memory_space<vmem>>, vector<1x128xf32>
    %313 = vector.broadcast %312 : vector<1x128xf32> to vector<64x128xf32>
    %314 = arith.addf %311, %313 : vector<64x128xf32>
    %315 = vector.shape_cast %314 : vector<64x128xf32> to vector<8x8x128xf32>
    %c0_160 = arith.constant 0 : index
    %c0_161 = arith.constant 0 : index
    %c0_162 = arith.constant 0 : index
    %316 = vector.load %arg6[%c0_160, %c0_161, %c0_162] : memref<8x8x128xf32, #tpu.memory_space<vmem>>, vector<8x8x128xf32>
    tpu.vector_store %arg6[%c0_160, %c0_161, %c0_162], %315 {strides = array<i32>} : memref<8x8x128xf32, #tpu.memory_space<vmem>>, vector<8x8x128xf32>,
    return
  }
  func.func @transform_0(%arg0: i32, %arg1: i32) -> (i32, i32, i32) {
    %c0_i32 = arith.constant 0 : i32
    %c0_i32_0 = arith.constant 0 : i32
    return %arg1, %arg0, %c0_i32 : i32, i32, i32
  }
  func.func @transform_1(%arg0: i32, %arg1: i32) -> (i32, i32) {
    %c0_i32 = arith.constant 0 : i32
    %c0_i32_0 = arith.constant 0 : i32
    %c0_i32_1 = arith.constant 0 : i32
    return %c0_i32, %c0_i32_0 : i32, i32
  }
  func.func @transform_2(%arg0: i32, %arg1: i32) -> (i32, i32) {
    %c0_i32 = arith.constant 0 : i32
    %c0_i32_0 = arith.constant 0 : i32
    %c0_i32_1 = arith.constant 0 : i32
    return %c0_i32, %c0_i32_0 : i32, i32
  }
  func.func @transform_3(%arg0: i32, %arg1: i32) -> (i32, i32) {
    %c0_i32 = arith.constant 0 : i32
    %c0_i32_0 = arith.constant 0 : i32
    %c0_i32_1 = arith.constant 0 : i32
    return %c0_i32, %c0_i32_0 : i32, i32
  }
  func.func @transform_4(%arg0: i32, %arg1: i32) -> (i32, i32, i32) {
    %c0_i32 = arith.constant 0 : i32
    %c0_i32_0 = arith.constant 0 : i32
    return %arg1, %arg0, %c0_i32 : i32, i32, i32
  }
}

</mosaic_0001>

<llo_original>
// kernel: bert_2dcnn_lstm_forward.2
$region0: #{bert_2dcnn_lstm_forward.2}
  #allocation0 [shape = 'u32[]', space=smem, size = 0x4, offset = 0x4, fixed_abs, tag = 'smem constant byte address 0x4 - core index']
  #allocation1 [shape = 'u32[72,128]{1,0:T(1,128)}', space=vmem, size = 0x9000, scoped, tag = 'internal scratch']
  %s0 = inlined_call_operand.vmem [shape: bf16[10,8,32], index: 0, kind: input, shape index: {}]
  %s1 = inlined_call_operand.vmem [shape: bf16[3,32,128], index: 1, kind: input, shape index: {}]
  %s2 = inlined_call_operand.vmem [shape: f32[1,128], index: 2, kind: input, shape index: {}]
  %s3 = inlined_call_operand.vmem [shape: bf16[128,128], index: 3, kind: input, shape index: {}]
  %s4 = inlined_call_operand.vmem [shape: f32[1,128], index: 4, kind: input, shape index: {}]
  %s5 = inlined_call_operand.vmem [shape: f32[8,8,128], index: 5, kind: output, shape index: {}]
  %s6 = sld [smem:[#allocation0]]
  $region30: #{bert_2dcnn_lstm_forward.2} parent=0
    _
  %s8 = ssub.s32 1, %s6
  %s9 = scalar_select 0, %s8, %s6
  // Predicated region
  $region2: #{bert_2dcnn_lstm_forward.2} parent=0 // pred_check
    _
  $region3: #{bert_2dcnn_lstm_forward.2} parent=0 // pred_check_branch
    %11 = sbr.rel (0) target = $region5
  $region4: #{bert_2dcnn_lstm_forward.2} parent=0 // pred_region
    _
  $region5: #{bert_2dcnn_lstm_forward.2} parent=0 // pred_fallthru
    _
  // Predicated region
  $region6: #{bert_2dcnn_lstm_forward.2} parent=0 // pred_check
    _
  $region7: #{bert_2dcnn_lstm_forward.2} parent=0 // pred_check_branch
    %13 = sbr.rel (0) target = $region9
  $region8: #{bert_2dcnn_lstm_forward.2} parent=0 // pred_region
    _
  $region9: #{bert_2dcnn_lstm_forward.2} parent=0 // pred_fallthru
    _
  // Predicated region
  $region10: #{bert_2dcnn_lstm_forward.2} parent=0 // pred_check
    _
  $region11: #{bert_2dcnn_lstm_forward.2} parent=0 // pred_check_branch
    %15 = sbr.rel (0) target = $region13
  $region12: #{bert_2dcnn_lstm_forward.2} parent=0 // pred_region
    _
  $region13: #{bert_2dcnn_lstm_forward.2} parent=0 // pred_fallthru
    _
  // Predicated region
  $region14: #{bert_2dcnn_lstm_forward.2} parent=0 // pred_check
    _
  $region15: #{bert_2dcnn_lstm_forward.2} parent=0 // pred_check_branch
    %17 = sbr.rel (0) target = $region17
  $region16: #{bert_2dcnn_lstm_forward.2} parent=0 // pred_region
    _
  $region17: #{bert_2dcnn_lstm_forward.2} parent=0 // pred_fallthru
    _
  // Predicated region
  $region18: #{bert_2dcnn_lstm_forward.2} parent=0 // pred_check
    _
  $region19: #{bert_2dcnn_lstm_forward.2} parent=0 // pred_check_branch
    %19 = sbr.rel (0) target = $region21
  $region20: #{bert_2dcnn_lstm_forward.2} parent=0 // pred_region
    _
  $region21: #{bert_2dcnn_lstm_forward.2} parent=0 // pred_fallthru
    _
  %s21 = smul.u32 0, 8
  %s22 = smul.addr %s21, 4
  %s23 = scalar_lea.vmem %s0, %s22
  %v24 = vld [vmem:[%s23] sm:$0xf]
  %v25 = vld [vmem:[%s23 + $0x4] sm:$0xf]
  %v26 = vld [vmem:[%s23 + $0x8] sm:$0xf]
  %v27 = vld [vmem:[%s23 + $0xc] sm:$0xf]
  %v28 = vld [vmem:[%s23 + $0x10] sm:$0xf]
  %v29 = vld [vmem:[%s23 + $0x14] sm:$0xf]
  %v30 = vld [vmem:[%s23 + $0x18] sm:$0xf]
  %v31 = vld [vmem:[%s23 + $0x1c] sm:$0xf]
  %v32 = vld [vmem:[%s1] sm:$0xf]
  %v33 = vld [vmem:[%s1 + $0x4] sm:$0xf]
  %v34 = vld [vmem:[%s1 + $0x8] sm:$0xf]
  %v35 = vld [vmem:[%s1 + $0xc] sm:$0xf]
  %s36 = sadd.s32 %s21, 1
  %s37 = smul.addr %s36, 4
  %s38 = scalar_lea.vmem %s0, %s37
  %v39 = vld [vmem:[%s38] sm:$0xf]
  %v40 = vld [vmem:[%s38 + $0x4] sm:$0xf]
  %v41 = vld [vmem:[%s38 + $0x8] sm:$0xf]
  %v42 = vld [vmem:[%s38 + $0xc] sm:$0xf]
  %v43 = vld [vmem:[%s38 + $0x10] sm:$0xf]
  %v44 = vld [vmem:[%s38 + $0x14] sm:$0xf]
  %v45 = vld [vmem:[%s38 + $0x18] sm:$0xf]
  %v46 = vld [vmem:[%s38 + $0x1c] sm:$0xf]
  %s47 = scalar_lea.vmem %s1, 16
  %v48 = vld [vmem:[%s47] sm:$0xf]
  %v49 = vld [vmem:[%s47 + $0x4] sm:$0xf]
  %v50 = vld [vmem:[%s47 + $0x8] sm:$0xf]
  %v51 = vld [vmem:[%s47 + $0xc] sm:$0xf]
  %v60 = vunpack.c.l.b16 %v39
  %v61 = vunpack.c.l.b16 %v40
  %v62 = vunpack.c.l.b16 %v41
  %v63 = vunpack.c.l.b16 %v42
  %v64 = vunpack.c.l.b16 %v43
  %v65 = vunpack.c.l.b16 %v44
  %v66 = vunpack.c.l.b16 %v45
  %v67 = vunpack.c.l.b16 %v46
  %v68 = vpack.c.b16 %v61, %v60
  %v69 = vpack.c.b16 %v63, %v62
  %v70 = vpack.c.b16 %v65, %v64
  %v71 = vpack.c.b16 %v67, %v66
  %v76 = vunpack.c.l.b16 %v48
  %v77 = vunpack.c.l.b16 %v49
  %v78 = vunpack.c.l.b16 %v50
  %v79 = vunpack.c.l.b16 %v51
  %v80 = vpack.c.b16 %v77, %v76
  %v81 = vpack.c.b16 %v79, %v78
  %vm84 = vcmask 261120
  %v86 = vsel %vm84, %v68, 0
  %v89 = vsel %vm84, %v69, 0
  %v92 = vsel %vm84, %v70, 0
  %v95 = vsel %vm84, %v71, 0
  %97 = vmatpush.bf16.msra.mxu0 0
  %98 = vmatpush.bf16.msra.mxu0 0
  %99 = vmatpush.bf16.msra.mxu0 0
  %100 = vmatpush.bf16.msra.mxu0 0
  %101 = vmatpush.bf16.msra.mxu0 0
  %102 = vmatpush.bf16.msra.mxu0 0
  %103 = vmatpush.bf16.msra.mxu0 %v81
  %104 = vmatpush.bf16.msra.mxu0 %v80
  %105 = vmatmul.bf16.gmra.mxu0 %v86
  %v106 = vpop.f32.mrf.mxu0
  %v107 = vadd.f32 0.0, %v106
  %v108 = vpop.f32.mrf.mxu0
  %v109 = vadd.f32 0.0, %v108
  %110 = vmatmul.bf16.gmra.mxu0 %v89
  %v111 = vpop.f32.mrf.mxu0
  %v112 = vadd.f32 0.0, %v111
  %v113 = vpop.f32.mrf.mxu0
  %v114 = vadd.f32 0.0, %v113
  %115 = vmatmul.bf16.gmra.mxu0 %v92
  %v116 = vpop.f32.mrf.mxu0
  %v117 = vadd.f32 0.0, %v116
  %v118 = vpop.f32.mrf.mxu0
  %v119 = vadd.f32 0.0, %v118
  %120 = vmatmul.bf16.gmra.mxu0 %v95
  %v121 = vpop.f32.mrf.mxu0
  %v122 = vadd.f32 0.0, %v121
  %v123 = vpop.f32.mrf.mxu0
  %v124 = vadd.f32 0.0, %v123
  %125 = vdwg.mxu0
  %v134 = vunpack.c.l.b16 %v24
  %v135 = vunpack.c.l.b16 %v25
  %v136 = vunpack.c.l.b16 %v26
  %v137 = vunpack.c.l.b16 %v27
  %v138 = vunpack.c.l.b16 %v28
  %v139 = vunpack.c.l.b16 %v29
  %v140 = vunpack.c.l.b16 %v30
  %v141 = vunpack.c.l.b16 %v31
  %v142 = vpack.c.b16 %v135, %v134
  %v143 = vpack.c.b16 %v137, %v136
  %v144 = vpack.c.b16 %v139, %v138
  %v145 = vpack.c.b16 %v141, %v140
  %v150 = vunpack.c.l.b16 %v32
  %v151 = vunpack.c.l.b16 %v33
  %v152 = vunpack.c.l.b16 %v34
  %v153 = vunpack.c.l.b16 %v35
  %v154 = vpack.c.b16 %v151, %v150
  %v155 = vpack.c.b16 %v153, %v152
  %v159 = vsel %vm84, %v142, 0
  %v162 = vsel %vm84, %v143, 0
  %v165 = vsel %vm84, %v144, 0
  %v168 = vsel %vm84, %v145, 0
  %170 = vmatpush.bf16.msra.mxu0 0
  %171 = vmatpush.bf16.msra.mxu0 0
  %172 = vmatpush.bf16.msra.mxu0 0
  %173 = vmatpush.bf16.msra.mxu0 0
  %174 = vmatpush.bf16.msra.mxu0 0
  %175 = vmatpush.bf16.msra.mxu0 0
  %176 = vmatpush.bf16.msra.mxu0 %v155
  %177 = vmatpush.bf16.msra.mxu0 %v154
  %178 = vmatmul.bf16.gmra.mxu0 %v159
  %v179 = vpop.f32.mrf.mxu0
  %v180 = vadd.f32 %v107, %v179
  %v181 = vpop.f32.mrf.mxu0
  %v182 = vadd.f32 %v109, %v181
  %183 = vmatmul.bf16.gmra.mxu0 %v162
  %v184 = vpop.f32.mrf.mxu0
  %v185 = vadd.f32 %v112, %v184
  %v186 = vpop.f32.mrf.mxu0
  %v187 = vadd.f32 %v114, %v186
  %188 = vmatmul.bf16.gmra.mxu0 %v165
  %v189 = vpop.f32.mrf.mxu0
  %v190 = vadd.f32 %v117, %v189
  %v191 = vpop.f32.mrf.mxu0
  %v192 = vadd.f32 %v119, %v191
  %193 = vmatmul.bf16.gmra.mxu0 %v168
  %v194 = vpop.f32.mrf.mxu0
  %v195 = vadd.f32 %v122, %v194
  %v196 = vpop.f32.mrf.mxu0
  %v197 = vadd.f32 %v124, %v196
  %198 = vdwg.mxu0
  %s199 = sadd.s32 %s21, 2
  %s200 = smul.addr %s199, 4
  %s201 = scalar_lea.vmem %s0, %s200
  %v202 = vld [vmem:[%s201] sm:$0xf]
  %v203 = vld [vmem:[%s201 + $0x4] sm:$0xf]
  %v204 = vld [vmem:[%s201 + $0x8] sm:$0xf]
  %v205 = vld [vmem:[%s201 + $0xc] sm:$0xf]
  %v206 = vld [vmem:[%s201 + $0x10] sm:$0xf]
  %v207 = vld [vmem:[%s201 + $0x14] sm:$0xf]
  %v208 = vld [vmem:[%s201 + $0x18] sm:$0xf]
  %v209 = vld [vmem:[%s201 + $0x1c] sm:$0xf]
  %s210 = scalar_lea.vmem %s1, 32
  %v211 = vld [vmem:[%s210] sm:$0xf]
  %v212 = vld [vmem:[%s210 + $0x4] sm:$0xf]
  %v213 = vld [vmem:[%s210 + $0x8] sm:$0xf]
  %v214 = vld [vmem:[%s210 + $0xc] sm:$0xf]
  %v223 = vunpack.c.l.b16 %v202
  %v224 = vunpack.c.l.b16 %v203
  %v225 = vunpack.c.l.b16 %v204
  %v226 = vunpack.c.l.b16 %v205
  %v227 = vunpack.c.l.b16 %v206
  %v228 = vunpack.c.l.b16 %v207
  %v229 = vunpack.c.l.b16 %v208
  %v230 = vunpack.c.l.b16 %v209
  %v231 = vpack.c.b16 %v224, %v223
  %v232 = vpack.c.b16 %v226, %v225
  %v233 = vpack.c.b16 %v228, %v227
  %v234 = vpack.c.b16 %v230, %v229
  %v239 = vunpack.c.l.b16 %v211
  %v240 = vunpack.c.l.b16 %v212
  %v241 = vunpack.c.l.b16 %v213
  %v242 = vunpack.c.l.b16 %v214
  %v243 = vpack.c.b16 %v240, %v239
  %v244 = vpack.c.b16 %v242, %v241
  %v248 = vsel %vm84, %v231, 0
  %v251 = vsel %vm84, %v232, 0
  %v254 = vsel %vm84, %v233, 0
  %v257 = vsel %vm84, %v234, 0
  %259 = vmatpush.bf16.msra.mxu0 0
  %260 = vmatpush.bf16.msra.mxu0 0
  %261 = vmatpush.bf16.msra.mxu0 0
  %262 = vmatpush.bf16.msra.mxu0 0
  %263 = vmatpush.bf16.msra.mxu0 0
  %264 = vmatpush.bf16.msra.mxu0 0
  %265 = vmatpush.bf16.msra.mxu0 %v244
  %266 = vmatpush.bf16.msra.mxu0 %v243
  %267 = vmatmul.bf16.gmra.mxu0 %v248
  %v268 = vpop.f32.mrf.mxu0
  %v269 = vadd.f32 0.0, %v268
  %v270 = vpop.f32.mrf.mxu0
  %v271 = vadd.f32 0.0, %v270
  %272 = vmatmul.bf16.gmra.mxu0 %v251
  %v273 = vpop.f32.mrf.mxu0
  %v274 = vadd.f32 0.0, %v273
  %v275 = vpop.f32.mrf.mxu0
  %v276 = vadd.f32 0.0, %v275
  %277 = vmatmul.bf16.gmra.mxu0 %v254
  %v278 = vpop.f32.mrf.mxu0
  %v279 = vadd.f32 0.0, %v278
  %v280 = vpop.f32.mrf.mxu0
  %v281 = vadd.f32 0.0, %v280
  %282 = vmatmul.bf16.gmra.mxu0 %v257
  %v283 = vpop.f32.mrf.mxu0
  %v284 = vadd.f32 0.0, %v283
  %v285 = vpop.f32.mrf.mxu0
  %v286 = vadd.f32 0.0, %v285
  %287 = vdwg.mxu0
  %v288 = vadd.f32 %v180, %v269
  %v289 = vadd.f32 %v182, %v271
  %v290 = vadd.f32 %v185, %v274
  %v291 = vadd.f32 %v187, %v276
  %v292 = vadd.f32 %v190, %v279
  %v293 = vadd.f32 %v192, %v281
  %v294 = vadd.f32 %v195, %v284
  %v295 = vadd.f32 %v197, %v286
  %v296 = vld [vmem:[%s2] sm:$0x1]
  %v298 = vperm.slane %v296, 0
  %v300 = vadd.f32 %v288, %v298
  %v301 = vadd.f32 %v289, %v298
  %v302 = vadd.f32 %v290, %v298
  %v303 = vadd.f32 %v291, %v298
  %v304 = vadd.f32 %v292, %v298
  %v305 = vadd.f32 %v293, %v298
  %v306 = vadd.f32 %v294, %v298
  %v307 = vadd.f32 %v295, %v298
  %v308 = vpack.c.bf16 %v301, %v300
  %v309 = vpack.c.bf16 %v303, %v302
  %v310 = vpack.c.bf16 %v305, %v304
  %v311 = vpack.c.bf16 %v307, %v306
  %v312 = vld [vmem:[%s3] sm:$0xf]
  %v313 = vld [vmem:[%s3 + $0x4] sm:$0xf]
  %v314 = vld [vmem:[%s3 + $0x8] sm:$0xf]
  %v315 = vld [vmem:[%s3 + $0xc] sm:$0xf]
  %v316 = vld [vmem:[%s3 + $0x10] sm:$0xf]
  %v317 = vld [vmem:[%s3 + $0x14] sm:$0xf]
  %v318 = vld [vmem:[%s3 + $0x18] sm:$0xf]
  %v319 = vld [vmem:[%s3 + $0x1c] sm:$0xf]
  %v320 = vld [vmem:[%s3 + $0x20] sm:$0xf]
  %v321 = vld [vmem:[%s3 + $0x24] sm:$0xf]
  %v322 = vld [vmem:[%s3 + $0x28] sm:$0xf]
  %v323 = vld [vmem:[%s3 + $0x2c] sm:$0xf]
  %v324 = vld [vmem:[%s3 + $0x30] sm:$0xf]
  %v325 = vld [vmem:[%s3 + $0x34] sm:$0xf]
  %v326 = vld [vmem:[%s3 + $0x38] sm:$0xf]
  %v327 = vld [vmem:[%s3 + $0x3c] sm:$0xf]
  %v328 = vld [vmem:[%s4] sm:$0x1]
  %v330 = vperm.slane %v328, 0
  %v348 = vunpack.c.l.b16 %v312
  %v349 = vunpack.c.l.b16 %v313
  %v350 = vunpack.c.l.b16 %v314
  %v351 = vunpack.c.l.b16 %v315
  %v352 = vunpack.c.l.b16 %v316
  %v353 = vunpack.c.l.b16 %v317
  %v354 = vunpack.c.l.b16 %v318
  %v355 = vunpack.c.l.b16 %v319
  %v356 = vunpack.c.l.b16 %v320
  %v357 = vunpack.c.l.b16 %v321
  %v358 = vunpack.c.l.b16 %v322
  %v359 = vunpack.c.l.b16 %v323
  %v360 = vunpack.c.l.b16 %v324
  %v361 = vunpack.c.l.b16 %v325
  %v362 = vunpack.c.l.b16 %v326
  %v363 = vunpack.c.l.b16 %v327
  %v364 = vpack.c.b16 %v349, %v348
  %v365 = vpack.c.b16 %v351, %v350
  %v366 = vpack.c.b16 %v353, %v352
  %v367 = vpack.c.b16 %v355, %v354
  %v368 = vpack.c.b16 %v357, %v356
  %v369 = vpack.c.b16 %v359, %v358
  %v370 = vpack.c.b16 %v361, %v360
  %v371 = vpack.c.b16 %v363, %v362
  %380 = vmatpush.bf16.msra.mxu0 %v371
  %381 = vmatpush.bf16.msra.mxu0 %v370
  %382 = vmatpush.bf16.msra.mxu0 %v369
  %383 = vmatpush.bf16.msra.mxu0 %v368
  %384 = vmatpush.bf16.msra.mxu0 %v367
  %385 = vmatpush.bf16.msra.mxu0 %v366
  %386 = vmatpush.bf16.msra.mxu0 %v365
  %387 = vmatpush.bf16.msra.mxu0 %v364
  %388 = vmatmul.bf16.gmra.mxu0 %v308
  %v389 = vpop.f32.mrf.mxu0
  %v390 = vadd.f32 %v330, %v389
  %v391 = vpop.f32.mrf.mxu0
  %v392 = vadd.f32 %v330, %v391
  %393 = vmatmul.bf16.gmra.mxu0 %v309
  %v394 = vpop.f32.mrf.mxu0
  %v395 = vadd.f32 %v330, %v394
  %v396 = vpop.f32.mrf.mxu0
  %v397 = vadd.f32 %v330, %v396
  %398 = vmatmul.bf16.gmra.mxu0 %v310
  %v399 = vpop.f32.mrf.mxu0
  %v400 = vadd.f32 %v330, %v399
  %v401 = vpop.f32.mrf.mxu0
  %v402 = vadd.f32 %v330, %v401
  %403 = vmatmul.bf16.gmra.mxu0 %v311
  %v404 = vpop.f32.mrf.mxu0
  %v405 = vadd.f32 %v330, %v404
  %v406 = vpop.f32.mrf.mxu0
  %v407 = vadd.f32 %v330, %v406
  %408 = vdwg.mxu0
  %409 = vst [vmem:[%s5] sm:$0xff] %v390
  %410 = vst [vmem:[%s5 + $0x8] sm:$0xff] %v392
  %411 = vst [vmem:[%s5 + $0x10] sm:$0xff] %v395
  %412 = vst [vmem:[%s5 + $0x18] sm:$0xff] %v397
  %413 = vst [vmem:[%s5 + $0x20] sm:$0xff] %v400
  %414 = vst [vmem:[%s5 + $0x28] sm:$0xff] %v402
  %415 = vst [vmem:[%s5 + $0x30] sm:$0xff] %v405
  %416 = vst [vmem:[%s5 + $0x38] sm:$0xff] %v407
  // Predicated region
  $region22: #{bert_2dcnn_lstm_forward.2} parent=0 // pred_check
    _
  $region23: #{bert_2dcnn_lstm_forward.2} parent=0 // pred_check_branch
    %418 = sbr.rel (0) target = $region25
  $region24: #{bert_2dcnn_lstm_forward.2} parent=0 // pred_region
    _
  $region25: #{bert_2dcnn_lstm_forward.2} parent=0 // pred_fallthru
    _
  // Predicated region
  $region26: #{bert_2dcnn_lstm_forward.2} parent=0 // pred_check
    _
  $region27: #{bert_2dcnn_lstm_forward.2} parent=0 // pred_check_branch
    %420 = sbr.rel (0) target = $region29
  $region28: #{bert_2dcnn_lstm_forward.2} parent=0 // pred_region
    _
  $region29: #{bert_2dcnn_lstm_forward.2} parent=0 // pred_fallthru
    _

// kernel: bert_2dcnn_lstm_forward.3
$region0: #{bert_2dcnn_lstm_forward.3}
  #allocation0 [shape = 'u32[]', space=smem, size = 0x4, offset = 0x4, fixed_abs, tag = 'smem constant byte address 0x4 - core index']
  #allocation1 [shape = 'u32[72,128]{1,0:T(1,128)}', space=vmem, size = 0x9000, scoped, tag = 'internal scratch']
  #allocation2 [shape = 'f32[8,32]{1,0:T(8,128)}', space=vmem, size = 0x1000, scoped, tag = 'scratch operand']
  #allocation3 [shape = 'f32[8,32]{1,0:T(8,128)}', space=vmem, size = 0x1000, scoped, tag = 'scratch operand']
  #allocation4 [shape = 'f32[8,8,32]{2,1,0:T(8,128)}', space=vmem, size = 0x8000, scoped, tag = 'scratch operand']
  %s0 = inlined_call_operand.vmem [shape: f32[8,8,128], index: 0, kind: input, shape index: {}]
  %s1 = inlined_call_operand.vmem [shape: bf16[32,128], index: 1, kind: input, shape index: {}]
  %s2 = inlined_call_operand.vmem [shape: bf16[32,128], index: 2, kind: input, shape index: {}]
  %s3 = inlined_call_operand.vmem [shape: f32[1,128], index: 3, kind: input, shape index: {}]
  %s4 = inlined_call_operand.vmem [shape: f32[8,8,128], index: 4, kind: output, shape index: {}]
  %s5 = sld [smem:[#allocation0]]
  $region30: #{bert_2dcnn_lstm_forward.3} parent=0
    _
  %s7 = ssub.s32 1, %s5
  %s8 = scalar_select 0, %s7, %s5
  // Predicated region
  $region2: #{bert_2dcnn_lstm_forward.3} parent=0 // pred_check
    _
  $region3: #{bert_2dcnn_lstm_forward.3} parent=0 // pred_check_branch
    %10 = sbr.rel (0) target = $region5
  $region4: #{bert_2dcnn_lstm_forward.3} parent=0 // pred_region
    _
  $region5: #{bert_2dcnn_lstm_forward.3} parent=0 // pred_fallthru
    _
  // Predicated region
  $region6: #{bert_2dcnn_lstm_forward.3} parent=0 // pred_check
    _
  $region7: #{bert_2dcnn_lstm_forward.3} parent=0 // pred_check_branch
    %12 = sbr.rel (0) target = $region9
  $region8: #{bert_2dcnn_lstm_forward.3} parent=0 // pred_region
    _
  $region9: #{bert_2dcnn_lstm_forward.3} parent=0 // pred_fallthru
    _
  // Predicated region
  $region10: #{bert_2dcnn_lstm_forward.3} parent=0 // pred_check
    _
  $region11: #{bert_2dcnn_lstm_forward.3} parent=0 // pred_check_branch
    %14 = sbr.rel (0) target = $region13
  $region12: #{bert_2dcnn_lstm_forward.3} parent=0 // pred_region
    _
  $region13: #{bert_2dcnn_lstm_forward.3} parent=0 // pred_fallthru
    _
  // Predicated region
  $region14: #{bert_2dcnn_lstm_forward.3} parent=0 // pred_check
    _
  $region15: #{bert_2dcnn_lstm_forward.3} parent=0 // pred_check_branch
    %16 = sbr.rel (0) target = $region17
  $region16: #{bert_2dcnn_lstm_forward.3} parent=0 // pred_region
    _
  $region17: #{bert_2dcnn_lstm_forward.3} parent=0 // pred_fallthru
    _
  %p18 = scmp.eq.s32.totalorder 0, 0
  // Predicated region
  $region18: #{bert_2dcnn_lstm_forward.3} parent=0 // pred_check
    %p19 = pneg %p18
  $region19: #{bert_2dcnn_lstm_forward.3} parent=0 // pred_check_branch
    %21 = sbr.rel (%p19) target = $region21
  $region20: #{bert_2dcnn_lstm_forward.3} parent=0 // pred_region
    %vm22 = vcmask 261120
    %23 = vst.msk [vmem:[#allocation2] sm:$0xff] %vm22, 0.0
    %24 = vst.msk [vmem:[#allocation3] sm:$0xff] %vm22, 0.0
  $region21: #{bert_2dcnn_lstm_forward.3} parent=0 // pred_fallthru
    _
  %v25 = vld [vmem:[%s0] sm:$0xff]
  %v26 = vld [vmem:[#allocation2] sm:$0xff]
  %v27 = vpack.c.bf16 %v26, %v26
  %v28 = vld [vmem:[%s1] sm:$0xf]
  %v29 = vld [vmem:[%s1 + $0x4] sm:$0xf]
  %v30 = vld [vmem:[%s1 + $0x8] sm:$0xf]
  %v31 = vld [vmem:[%s1 + $0xc] sm:$0xf]
  %v36 = vunpack.c.l.b16 %v28
  %v37 = vunpack.c.l.b16 %v29
  %v38 = vunpack.c.l.b16 %v30
  %v39 = vunpack.c.l.b16 %v31
  %v40 = vpack.c.b16 %v37, %v36
  %v41 = vpack.c.b16 %v39, %v38
  %vm44 = vcmask 261120
  %v46 = vsel %vm44, %v27, 0
  %48 = vmatpush.bf16.msra.mxu0 0
  %49 = vmatpush.bf16.msra.mxu0 0
  %50 = vmatpush.bf16.msra.mxu0 0
  %51 = vmatpush.bf16.msra.mxu0 0
  %52 = vmatpush.bf16.msra.mxu0 0
  %53 = vmatpush.bf16.msra.mxu0 0
  %54 = vmatpush.bf16.msra.mxu0 %v41
  %55 = vmatpush.bf16.msra.mxu0 %v40
  %56 = vmatmul.bf16.gmra.mxu0 %v46
  %v57 = vpop.f32.mrf.mxu0
  %v58 = vadd.f32 0.0, %v57
  %v59 = vpop.f32.mrf.mxu0
  %60 = vdwg.mxu0
  %v61 = vadd.f32 %v25, %v58
  %v62 = vxor.u32 %v61, 2147483648
  %v63 = vmul.f32 %v62, 1.442695
  %v64 = vpow.pop %v63
  %v65 = vadd.f32 %v64, 1.0
  %v66 = vrcp.pop %v65
  %v67 = vmul.f32 %v65, %v66
  %v68 = vsub.f32 1.0, %v67
  %v69 = vmul.f32 %v66, %v68
  %v70 = vadd.f32 %v66, %v69
  %vm71 = vweird.f32 %v65
  %vm72 = vweird.f32 %v66
  %vm73 = vmor %vm71, %vm72
  %v74 = vsel %vm73, %v66, %v70
  %v75 = vand.u32 2147483647, %v65
  %vm76 = vcmp.eq.f32.partialorder %v75, 8.507059e+37
  %v77 = vand.u32 %v65, 2147483648
  %v78 = vor.u32 1.1754944e-38, %v77
  %v79 = vsel %vm76, %v78, %v74
  %v80 = vmul.f32 1.0, %v79
  %v81 = vtanh.pop %v61
  %v82 = vld [vmem:[#allocation3] sm:$0xff]
  %84 = vrot.lane.b32.xlu0 %v82, 32
  %v85 = vpop.permute.xlu0 %84
  %v87 = vmul.f32 %v80, %v85
  %89 = vrot.lane.b32.xlu0 %v81, 64
  %v90 = vpop.permute.xlu0 %89
  %v92 = vmul.f32 %v80, %v90
  %94 = vrot.lane.b32.xlu0 %v92, 32
  %v95 = vpop.permute.xlu0 %94
  %v97 = vadd.f32 %v87, %v95
  %v98 = vtanh.pop %v97
  %100 = vrot.lane.b32.xlu0 %v98, 64
  %v101 = vpop.permute.xlu0 %100
  %v103 = vmul.f32 %v80, %v101
  %105 = vrot.lane.b32.xlu0 %v97, 96
  %v106 = vpop.permute.xlu0 %105
  %108 = vst.msk [vmem:[#allocation3] sm:$0xff] %vm44, %v106
  %110 = vrot.lane.b32.xlu0 %v103, 32
  %v111 = vpop.permute.xlu0 %110
  %113 = vst.msk [vmem:[#allocation2] sm:$0xff] %vm44, %v111
  %114 = vst.msk [vmem:[#allocation4] sm:$0xff] %vm44, %v111
  %s115 = scalar_lea.vmem %s0, 8
  %v116 = vld [vmem:[%s115] sm:$0xff]
  %v117 = vld [vmem:[#allocation2] sm:$0xff]
  %v118 = vpack.c.bf16 %v117, %v117
  %v119 = vld [vmem:[%s1] sm:$0xf]
  %v120 = vld [vmem:[%s1 + $0x4] sm:$0xf]
  %v121 = vld [vmem:[%s1 + $0x8] sm:$0xf]
  %v122 = vld [vmem:[%s1 + $0xc] sm:$0xf]
  %v127 = vunpack.c.l.b16 %v119
  %v128 = vunpack.c.l.b16 %v120
  %v129 = vunpack.c.l.b16 %v121
  %v130 = vunpack.c.l.b16 %v122
  %v131 = vpack.c.b16 %v128, %v127
  %v132 = vpack.c.b16 %v130, %v129
  %v136 = vsel %vm44, %v118, 0
  %138 = vmatpush.bf16.msra.mxu0 0
  %139 = vmatpush.bf16.msra.mxu0 0
  %140 = vmatpush.bf16.msra.mxu0 0
  %141 = vmatpush.bf16.msra.mxu0 0
  %142 = vmatpush.bf16.msra.mxu0 0
  %143 = vmatpush.bf16.msra.mxu0 0
  %144 = vmatpush.bf16.msra.mxu0 %v132
  %145 = vmatpush.bf16.msra.mxu0 %v131
  %146 = vmatmul.bf16.gmra.mxu0 %v136
  %v147 = vpop.f32.mrf.mxu0
  %v148 = vadd.f32 0.0, %v147
  %v149 = vpop.f32.mrf.mxu0
  %150 = vdwg.mxu0
  %v151 = vadd.f32 %v116, %v148
  %v152 = vxor.u32 %v151, 2147483648
  %v153 = vmul.f32 %v152, 1.442695
  %v154 = vpow.pop %v153
  %v155 = vadd.f32 %v154, 1.0
  %v156 = vrcp.pop %v155
  %v157 = vmul.f32 %v155, %v156
  %v158 = vsub.f32 1.0, %v157
  %v159 = vmul.f32 %v156, %v158
  %v160 = vadd.f32 %v156, %v159
  %vm161 = vweird.f32 %v155
  %vm162 = vweird.f32 %v156
  %vm163 = vmor %vm161, %vm162
  %v164 = vsel %vm163, %v156, %v160
  %v165 = vand.u32 2147483647, %v155
  %vm166 = vcmp.eq.f32.partialorder %v165, 8.507059e+37
  %v167 = vand.u32 %v155, 2147483648
  %v168 = vor.u32 1.1754944e-38, %v167
  %v169 = vsel %vm166, %v168, %v164
  %v170 = vmul.f32 1.0, %v169
  %v171 = vtanh.pop %v151
  %v172 = vld [vmem:[#allocation3] sm:$0xff]
  %174 = vrot.lane.b32.xlu0 %v172, 32
  %v175 = vpop.permute.xlu0 %174
  %v177 = vmul.f32 %v170, %v175
  %179 = vrot.lane.b32.xlu0 %v171, 64
  %v180 = vpop.permute.xlu0 %179
  %v182 = vmul.f32 %v170, %v180
  %184 = vrot.lane.b32.xlu0 %v182, 32
  %v185 = vpop.permute.xlu0 %184
  %v187 = vadd.f32 %v177, %v185
  %v188 = vtanh.pop %v187
  %190 = vrot.lane.b32.xlu0 %v188, 64
  %v191 = vpop.permute.xlu0 %190
  %v193 = vmul.f32 %v170, %v191
  %195 = vrot.lane.b32.xlu0 %v187, 96
  %v196 = vpop.permute.xlu0 %195
  %198 = vst.msk [vmem:[#allocation3] sm:$0xff] %vm44, %v196
  %200 = vrot.lane.b32.xlu0 %v193, 32
  %v201 = vpop.permute.xlu0 %200
  %203 = vst.msk [vmem:[#allocation2] sm:$0xff] %vm44, %v201
  %s204 = scalar_lea.vmem [#allocation4], 8
  %205 = vst.msk [vmem:[%s204] sm:$0xff] %vm44, %v201
  %s206 = scalar_lea.vmem %s0, 16
  %v207 = vld [vmem:[%s206] sm:$0xff]
  %v208 = vld [vmem:[#allocation2] sm:$0xff]
  %v209 = vpack.c.bf16 %v208, %v208
  %v210 = vld [vmem:[%s1] sm:$0xf]
  %v211 = vld [vmem:[%s1 + $0x4] sm:$0xf]
  %v212 = vld [vmem:[%s1 + $0x8] sm:$0xf]
  %v213 = vld [vmem:[%s1 + $0xc] sm:$0xf]
  %v218 = vunpack.c.l.b16 %v210
  %v219 = vunpack.c.l.b16 %v211
  %v220 = vunpack.c.l.b16 %v212
  %v221 = vunpack.c.l.b16 %v213
  %v222 = vpack.c.b16 %v219, %v218
  %v223 = vpack.c.b16 %v221, %v220
  %v227 = vsel %vm44, %v209, 0
  %229 = vmatpush.bf16.msra.mxu0 0
  %230 = vmatpush.bf16.msra.mxu0 0
  %231 = vmatpush.bf16.msra.mxu0 0
  %232 = vmatpush.bf16.msra.mxu0 0
  %233 = vmatpush.bf16.msra.mxu0 0
  %234 = vmatpush.bf16.msra.mxu0 0
  %235 = vmatpush.bf16.msra.mxu0 %v223
  %236 = vmatpush.bf16.msra.mxu0 %v222
  %237 = vmatmul.bf16.gmra.mxu0 %v227
  %v238 = vpop.f32.mrf.mxu0
  %v239 = vadd.f32 0.0, %v238
  %v240 = vpop.f32.mrf.mxu0
  %241 = vdwg.mxu0
  %v242 = vadd.f32 %v207, %v239
  %v243 = vxor.u32 %v242, 2147483648
  %v244 = vmul.f32 %v243, 1.442695
  %v245 = vpow.pop %v244
  %v246 = vadd.f32 %v245, 1.0
  %v247 = vrcp.pop %v246
  %v248 = vmul.f32 %v246, %v247
  %v249 = vsub.f32 1.0, %v248
  %v250 = vmul.f32 %v247, %v249
  %v251 = vadd.f32 %v247, %v250
  %vm252 = vweird.f32 %v246
  %vm253 = vweird.f32 %v247
  %vm254 = vmor %vm252, %vm253
  %v255 = vsel %vm254, %v247, %v251
  %v256 = vand.u32 2147483647, %v246
  %vm257 = vcmp.eq.f32.partialorder %v256, 8.507059e+37
  %v258 = vand.u32 %v246, 2147483648
  %v259 = vor.u32 1.1754944e-38, %v258
  %v260 = vsel %vm257, %v259, %v255
  %v261 = vmul.f32 1.0, %v260
  %v262 = vtanh.pop %v242
  %v263 = vld [vmem:[#allocation3] sm:$0xff]
  %265 = vrot.lane.b32.xlu0 %v263, 32
  %v266 = vpop.permute.xlu0 %265
  %v268 = vmul.f32 %v261, %v266
  %270 = vrot.lane.b32.xlu0 %v262, 64
  %v271 = vpop.permute.xlu0 %270
  %v273 = vmul.f32 %v261, %v271
  %275 = vrot.lane.b32.xlu0 %v273, 32
  %v276 = vpop.permute.xlu0 %275
  %v278 = vadd.f32 %v268, %v276
  %v279 = vtanh.pop %v278
  %281 = vrot.lane.b32.xlu0 %v279, 64
  %v282 = vpop.permute.xlu0 %281
  %v284 = vmul.f32 %v261, %v282
  %286 = vrot.lane.b32.xlu0 %v278, 96
  %v287 = vpop.permute.xlu0 %286
  %289 = vst.msk [vmem:[#allocation3] sm:$0xff] %vm44, %v287
  %291 = vrot.lane.b32.xlu0 %v284, 32
  %v292 = vpop.permute.xlu0 %291
  %294 = vst.msk [vmem:[#allocation2] sm:$0xff] %vm44, %v292
  %s295 = scalar_lea.vmem [#allocation4], 16
  %296 = vst.msk [vmem:[%s295] sm:$0xff] %vm44, %v292
  %s297 = scalar_lea.vmem %s0, 24
  %v298 = vld [vmem:[%s297] sm:$0xff]
  %v299 = vld [vmem:[#allocation2] sm:$0xff]
  %v300 = vpack.c.bf16 %v299, %v299
  %v301 = vld [vmem:[%s1] sm:$0xf]
  %v302 = vld [vmem:[%s1 + $0x4] sm:$0xf]
  %v303 = vld [vmem:[%s1 + $0x8] sm:$0xf]
  %v304 = vld [vmem:[%s1 + $0xc] sm:$0xf]
  %v309 = vunpack.c.l.b16 %v301
  %v310 = vunpack.c.l.b16 %v302
  %v311 = vunpack.c.l.b16 %v303
  %v312 = vunpack.c.l.b16 %v304
  %v313 = vpack.c.b16 %v310, %v309
  %v314 = vpack.c.b16 %v312, %v311
  %v318 = vsel %vm44, %v300, 0
  %320 = vmatpush.bf16.msra.mxu0 0
  %321 = vmatpush.bf16.msra.mxu0 0
  %322 = vmatpush.bf16.msra.mxu0 0
  %323 = vmatpush.bf16.msra.mxu0 0
  %324 = vmatpush.bf16.msra.mxu0 0
  %325 = vmatpush.bf16.msra.mxu0 0
  %326 = vmatpush.bf16.msra.mxu0 %v314
  %327 = vmatpush.bf16.msra.mxu0 %v313
  %328 = vmatmul.bf16.gmra.mxu0 %v318
  %v329 = vpop.f32.mrf.mxu0
  %v330 = vadd.f32 0.0, %v329
  %v331 = vpop.f32.mrf.mxu0
  %332 = vdwg.mxu0
  %v333 = vadd.f32 %v298, %v330
  %v334 = vxor.u32 %v333, 2147483648
  %v335 = vmul.f32 %v334, 1.442695
  %v336 = vpow.pop %v335
  %v337 = vadd.f32 %v336, 1.0
  %v338 = vrcp.pop %v337
  %v339 = vmul.f32 %v337, %v338
  %v340 = vsub.f32 1.0, %v339
  %v341 = vmul.f32 %v338, %v340
  %v342 = vadd.f32 %v338, %v341
  %vm343 = vweird.f32 %v337
  %vm344 = vweird.f32 %v338
  %vm345 = vmor %vm343, %vm344
  %v346 = vsel %vm345, %v338, %v342
  %v347 = vand.u32 2147483647, %v337
  %vm348 = vcmp.eq.f32.partialorder %v347, 8.507059e+37
  %v349 = vand.u32 %v337, 2147483648
  %v350 = vor.u32 1.1754944e-38, %v349
  %v351 = vsel %vm348, %v350, %v346
  %v352 = vmul.f32 1.0, %v351
  %v353 = vtanh.pop %v333
  %v354 = vld [vmem:[#allocation3] sm:$0xff]
  %356 = vrot.lane.b32.xlu0 %v354, 32
  %v357 = vpop.permute.xlu0 %356
  %v359 = vmul.f32 %v352, %v357
  %361 = vrot.lane.b32.xlu0 %v353, 64
  %v362 = vpop.permute.xlu0 %361
  %v364 = vmul.f32 %v352, %v362
  %366 = vrot.lane.b32.xlu0 %v364, 32
  %v367 = vpop.permute.xlu0 %366
  %v369 = vadd.f32 %v359, %v367
  %v370 = vtanh.pop %v369
  %372 = vrot.lane.b32.xlu0 %v370, 64
  %v373 = vpop.permute.xlu0 %372
  %v375 = vmul.f32 %v352, %v373
  %377 = vrot.lane.b32.xlu0 %v369, 96
  %v378 = vpop.permute.xlu0 %377
  %380 = vst.msk [vmem:[#allocation3] sm:$0xff] %vm44, %v378
  %382 = vrot.lane.b32.xlu0 %v375, 32
  %v383 = vpop.permute.xlu0 %382
  %385 = vst.msk [vmem:[#allocation2] sm:$0xff] %vm44, %v383
  %s386 = scalar_lea.vmem [#allocation4], 24
  %387 = vst.msk [vmem:[%s386] sm:$0xff] %vm44, %v383
  %s388 = scalar_lea.vmem %s0, 32
  %v389 = vld [vmem:[%s388] sm:$0xff]
  %v390 = vld [vmem:[#allocation2] sm:$0xff]
  %v391 = vpack.c.bf16 %v390, %v390
  %v392 = vld [vmem:[%s1] sm:$0xf]
  %v393 = vld [vmem:[%s1 + $0x4] sm:$0xf]
  %v394 = vld [vmem:[%s1 + $0x8] sm:$0xf]
  %v395 = vld [vmem:[%s1 + $0xc] sm:$0xf]
  %v400 = vunpack.c.l.b16 %v392
  %v401 = vunpack.c.l.b16 %v393
  %v402 = vunpack.c.l.b16 %v394
  %v403 = vunpack.c.l.b16 %v395
  %v404 = vpack.c.b16 %v401, %v400
  %v405 = vpack.c.b16 %v403, %v402
  %v409 = vsel %vm44, %v391, 0
  %411 = vmatpush.bf16.msra.mxu0 0
  %412 = vmatpush.bf16.msra.mxu0 0
  %413 = vmatpush.bf16.msra.mxu0 0
  %414 = vmatpush.bf16.msra.mxu0 0
  %415 = vmatpush.bf16.msra.mxu0 0
  %416 = vmatpush.bf16.msra.mxu0 0
  %417 = vmatpush.bf16.msra.mxu0 %v405
  %418 = vmatpush.bf16.msra.mxu0 %v404
  %419 = vmatmul.bf16.gmra.mxu0 %v409
  %v420 = vpop.f32.mrf.mxu0
  %v421 = vadd.f32 0.0, %v420
  %v422 = vpop.f32.mrf.mxu0
  %423 = vdwg.mxu0
  %v424 = vadd.f32 %v389, %v421
  %v425 = vxor.u32 %v424, 2147483648
  %v426 = vmul.f32 %v425, 1.442695
  %v427 = vpow.pop %v426
  %v428 = vadd.f32 %v427, 1.0
  %v429 = vrcp.pop %v428
  %v430 = vmul.f32 %v428, %v429
  %v431 = vsub.f32 1.0, %v430
  %v432 = vmul.f32 %v429, %v431
  %v433 = vadd.f32 %v429, %v432
  %vm434 = vweird.f32 %v428
  %vm435 = vweird.f32 %v429
  %vm436 = vmor %vm434, %vm435
  %v437 = vsel %vm436, %v429, %v433
  %v438 = vand.u32 2147483647, %v428
  %vm439 = vcmp.eq.f32.partialorder %v438, 8.507059e+37
  %v440 = vand.u32 %v428, 2147483648
  %v441 = vor.u32 1.1754944e-38, %v440
  %v442 = vsel %vm439, %v441, %v437
  %v443 = vmul.f32 1.0, %v442
  %v444 = vtanh.pop %v424
  %v445 = vld [vmem:[#allocation3] sm:$0xff]
  %447 = vrot.lane.b32.xlu0 %v445, 32
  %v448 = vpop.permute.xlu0 %447
  %v450 = vmul.f32 %v443, %v448
  %452 = vrot.lane.b32.xlu0 %v444, 64
  %v453 = vpop.permute.xlu0 %452
  %v455 = vmul.f32 %v443, %v453
  %457 = vrot.lane.b32.xlu0 %v455, 32
  %v458 = vpop.permute.xlu0 %457
  %v460 = vadd.f32 %v450, %v458
  %v461 = vtanh.pop %v460
  %463 = vrot.lane.b32.xlu0 %v461, 64
  %v464 = vpop.permute.xlu0 %463
  %v466 = vmul.f32 %v443, %v464
  %468 = vrot.lane.b32.xlu0 %v460, 96
  %v469 = vpop.permute.xlu0 %468
  %471 = vst.msk [vmem:[#allocation3] sm:$0xff] %vm44, %v469
  %473 = vrot.lane.b32.xlu0 %v466, 32
  %v474 = vpop.permute.xlu0 %473
  %476 = vst.msk [vmem:[#allocation2] sm:$0xff] %vm44, %v474
  %s477 = scalar_lea.vmem [#allocation4], 32
  %478 = vst.msk [vmem:[%s477] sm:$0xff] %vm44, %v474
  %s479 = scalar_lea.vmem %s0, 40
  %v480 = vld [vmem:[%s479] sm:$0xff]
  %v481 = vld [vmem:[#allocation2] sm:$0xff]
  %v482 = vpack.c.bf16 %v481, %v481
  %v483 = vld [vmem:[%s1] sm:$0xf]
  %v484 = vld [vmem:[%s1 + $0x4] sm:$0xf]
  %v485 = vld [vmem:[%s1 + $0x8] sm:$0xf]
  %v486 = vld [vmem:[%s1 + $0xc] sm:$0xf]
  %v491 = vunpack.c.l.b16 %v483
  %v492 = vunpack.c.l.b16 %v484
  %v493 = vunpack.c.l.b16 %v485
  %v494 = vunpack.c.l.b16 %v486
  %v495 = vpack.c.b16 %v492, %v491
  %v496 = vpack.c.b16 %v494, %v493
  %v500 = vsel %vm44, %v482, 0
  %502 = vmatpush.bf16.msra.mxu0 0
  %503 = vmatpush.bf16.msra.mxu0 0
  %504 = vmatpush.bf16.msra.mxu0 0
  %505 = vmatpush.bf16.msra.mxu0 0
  %506 = vmatpush.bf16.msra.mxu0 0
  %507 = vmatpush.bf16.msra.mxu0 0
  %508 = vmatpush.bf16.msra.mxu0 %v496
  %509 = vmatpush.bf16.msra.mxu0 %v495
  %510 = vmatmul.bf16.gmra.mxu0 %v500
  %v511 = vpop.f32.mrf.mxu0
  %v512 = vadd.f32 0.0, %v511
  %v513 = vpop.f32.mrf.mxu0
  %514 = vdwg.mxu0
  %v515 = vadd.f32 %v480, %v512
  %v516 = vxor.u32 %v515, 2147483648
  %v517 = vmul.f32 %v516, 1.442695
  %v518 = vpow.pop %v517
  %v519 = vadd.f32 %v518, 1.0
  %v520 = vrcp.pop %v519
  %v521 = vmul.f32 %v519, %v520
  %v522 = vsub.f32 1.0, %v521
  %v523 = vmul.f32 %v520, %v522
  %v524 = vadd.f32 %v520, %v523
  %vm525 = vweird.f32 %v519
  %vm526 = vweird.f32 %v520
  %vm527 = vmor %vm525, %vm526
  %v528 = vsel %vm527, %v520, %v524
  %v529 = vand.u32 2147483647, %v519
  %vm530 = vcmp.eq.f32.partialorder %v529, 8.507059e+37
  %v531 = vand.u32 %v519, 2147483648
  %v532 = vor.u32 1.1754944e-38, %v531
  %v533 = vsel %vm530, %v532, %v528
  %v534 = vmul.f32 1.0, %v533
  %v535 = vtanh.pop %v515
  %v536 = vld [vmem:[#allocation3] sm:$0xff]
  %538 = vrot.lane.b32.xlu0 %v536, 32
  %v539 = vpop.permute.xlu0 %538
  %v541 = vmul.f32 %v534, %v539
  %543 = vrot.lane.b32.xlu0 %v535, 64
  %v544 = vpop.permute.xlu0 %543
  %v546 = vmul.f32 %v534, %v544
  %548 = vrot.lane.b32.xlu0 %v546, 32
  %v549 = vpop.permute.xlu0 %548
  %v551 = vadd.f32 %v541, %v549
  %v552 = vtanh.pop %v551
  %554 = vrot.lane.b32.xlu0 %v552, 64
  %v555 = vpop.permute.xlu0 %554
  %v557 = vmul.f32 %v534, %v555
  %559 = vrot.lane.b32.xlu0 %v551, 96
  %v560 = vpop.permute.xlu0 %559
  %562 = vst.msk [vmem:[#allocation3] sm:$0xff] %vm44, %v560
  %564 = vrot.lane.b32.xlu0 %v557, 32
  %v565 = vpop.permute.xlu0 %564
  %567 = vst.msk [vmem:[#allocation2] sm:$0xff] %vm44, %v565
  %s568 = scalar_lea.vmem [#allocation4], 40
  %569 = vst.msk [vmem:[%s568] sm:$0xff] %vm44, %v565
  %s570 = scalar_lea.vmem %s0, 48
  %v571 = vld [vmem:[%s570] sm:$0xff]
  %v572 = vld [vmem:[#allocation2] sm:$0xff]
  %v573 = vpack.c.bf16 %v572, %v572
  %v574 = vld [vmem:[%s1] sm:$0xf]
  %v575 = vld [vmem:[%s1 + $0x4] sm:$0xf]
  %v576 = vld [vmem:[%s1 + $0x8] sm:$0xf]
  %v577 = vld [vmem:[%s1 + $0xc] sm:$0xf]
  %v582 = vunpack.c.l.b16 %v574
  %v583 = vunpack.c.l.b16 %v575
  %v584 = vunpack.c.l.b16 %v576
  %v585 = vunpack.c.l.b16 %v577
  %v586 = vpack.c.b16 %v583, %v582
  %v587 = vpack.c.b16 %v585, %v584
  %v591 = vsel %vm44, %v573, 0
  %593 = vmatpush.bf16.msra.mxu0 0
  %594 = vmatpush.bf16.msra.mxu0 0
  %595 = vmatpush.bf16.msra.mxu0 0
  %596 = vmatpush.bf16.msra.mxu0 0
  %597 = vmatpush.bf16.msra.mxu0 0
  %598 = vmatpush.bf16.msra.mxu0 0
  %599 = vmatpush.bf16.msra.mxu0 %v587
  %600 = vmatpush.bf16.msra.mxu0 %v586
  %601 = vmatmul.bf16.gmra.mxu0 %v591
  %v602 = vpop.f32.mrf.mxu0
  %v603 = vadd.f32 0.0, %v602
  %v604 = vpop.f32.mrf.mxu0
  %605 = vdwg.mxu0
  %v606 = vadd.f32 %v571, %v603
  %v607 = vxor.u32 %v606, 2147483648
  %v608 = vmul.f32 %v607, 1.442695
  %v609 = vpow.pop %v608
  %v610 = vadd.f32 %v609, 1.0
  %v611 = vrcp.pop %v610
  %v612 = vmul.f32 %v610, %v611
  %v613 = vsub.f32 1.0, %v612
  %v614 = vmul.f32 %v611, %v613
  %v615 = vadd.f32 %v611, %v614
  %vm616 = vweird.f32 %v610
  %vm617 = vweird.f32 %v611
  %vm618 = vmor %vm616, %vm617
  %v619 = vsel %vm618, %v611, %v615
  %v620 = vand.u32 2147483647, %v610
  %vm621 = vcmp.eq.f32.partialorder %v620, 8.507059e+37
  %v622 = vand.u32 %v610, 2147483648
  %v623 = vor.u32 1.1754944e-38, %v622
  %v624 = vsel %vm621, %v623, %v619
  %v625 = vmul.f32 1.0, %v624
  %v626 = vtanh.pop %v606
  %v627 = vld [vmem:[#allocation3] sm:$0xff]
  %629 = vrot.lane.b32.xlu0 %v627, 32
  %v630 = vpop.permute.xlu0 %629
  %v632 = vmul.f32 %v625, %v630
  %634 = vrot.lane.b32.xlu0 %v626, 64
  %v635 = vpop.permute.xlu0 %634
  %v637 = vmul.f32 %v625, %v635
  %639 = vrot.lane.b32.xlu0 %v637, 32
  %v640 = vpop.permute.xlu0 %639
  %v642 = vadd.f32 %v632, %v640
  %v643 = vtanh.pop %v642
  %645 = vrot.lane.b32.xlu0 %v643, 64
  %v646 = vpop.permute.xlu0 %645
  %v648 = vmul.f32 %v625, %v646
  %650 = vrot.lane.b32.xlu0 %v642, 96
  %v651 = vpop.permute.xlu0 %650
  %653 = vst.msk [vmem:[#allocation3] sm:$0xff] %vm44, %v651
  %655 = vrot.lane.b32.xlu0 %v648, 32
  %v656 = vpop.permute.xlu0 %655
  %658 = vst.msk [vmem:[#allocation2] sm:$0xff] %vm44, %v656
  %s659 = scalar_lea.vmem [#allocation4], 48
  %660 = vst.msk [vmem:[%s659] sm:$0xff] %vm44, %v656
  %s661 = scalar_lea.vmem %s0, 56
  %v662 = vld [vmem:[%s661] sm:$0xff]
  %v663 = vld [vmem:[#allocation2] sm:$0xff]
  %v664 = vpack.c.bf16 %v663, %v663
  %v665 = vld [vmem:[%s1] sm:$0xf]
  %v666 = vld [vmem:[%s1 + $0x4] sm:$0xf]
  %v667 = vld [vmem:[%s1 + $0x8] sm:$0xf]
  %v668 = vld [vmem:[%s1 + $0xc] sm:$0xf]
  %v673 = vunpack.c.l.b16 %v665
  %v674 = vunpack.c.l.b16 %v666
  %v675 = vunpack.c.l.b16 %v667
  %v676 = vunpack.c.l.b16 %v668
  %v677 = vpack.c.b16 %v674, %v673
  %v678 = vpack.c.b16 %v676, %v675
  %v682 = vsel %vm44, %v664, 0
  %684 = vmatpush.bf16.msra.mxu0 0
  %685 = vmatpush.bf16.msra.mxu0 0
  %686 = vmatpush.bf16.msra.mxu0 0
  %687 = vmatpush.bf16.msra.mxu0 0
  %688 = vmatpush.bf16.msra.mxu0 0
  %689 = vmatpush.bf16.msra.mxu0 0
  %690 = vmatpush.bf16.msra.mxu0 %v678
  %691 = vmatpush.bf16.msra.mxu0 %v677
  %692 = vmatmul.bf16.gmra.mxu0 %v682
  %v693 = vpop.f32.mrf.mxu0
  %v694 = vadd.f32 0.0, %v693
  %v695 = vpop.f32.mrf.mxu0
  %696 = vdwg.mxu0
  %v697 = vadd.f32 %v662, %v694
  %v698 = vxor.u32 %v697, 2147483648
  %v699 = vmul.f32 %v698, 1.442695
  %v700 = vpow.pop %v699
  %v701 = vadd.f32 %v700, 1.0
  %v702 = vrcp.pop %v701
  %v703 = vmul.f32 %v701, %v702
  %v704 = vsub.f32 1.0, %v703
  %v705 = vmul.f32 %v702, %v704
  %v706 = vadd.f32 %v702, %v705
  %vm707 = vweird.f32 %v701
  %vm708 = vweird.f32 %v702
  %vm709 = vmor %vm707, %vm708
  %v710 = vsel %vm709, %v702, %v706
  %v711 = vand.u32 2147483647, %v701
  %vm712 = vcmp.eq.f32.partialorder %v711, 8.507059e+37
  %v713 = vand.u32 %v701, 2147483648
  %v714 = vor.u32 1.1754944e-38, %v713
  %v715 = vsel %vm712, %v714, %v710
  %v716 = vmul.f32 1.0, %v715
  %v717 = vtanh.pop %v697
  %v718 = vld [vmem:[#allocation3] sm:$0xff]
  %720 = vrot.lane.b32.xlu0 %v718, 32
  %v721 = vpop.permute.xlu0 %720
  %v723 = vmul.f32 %v716, %v721
  %725 = vrot.lane.b32.xlu0 %v717, 64
  %v726 = vpop.permute.xlu0 %725
  %v728 = vmul.f32 %v716, %v726
  %730 = vrot.lane.b32.xlu0 %v728, 32
  %v731 = vpop.permute.xlu0 %730
  %v733 = vadd.f32 %v723, %v731
  %v734 = vtanh.pop %v733
  %736 = vrot.lane.b32.xlu0 %v734, 64
  %v737 = vpop.permute.xlu0 %736
  %v739 = vmul.f32 %v716, %v737
  %741 = vrot.lane.b32.xlu0 %v733, 96
  %v742 = vpop.permute.xlu0 %741
  %744 = vst.msk [vmem:[#allocation3] sm:$0xff] %vm44, %v742
  %746 = vrot.lane.b32.xlu0 %v739, 32
  %v747 = vpop.permute.xlu0 %746
  %749 = vst.msk [vmem:[#allocation2] sm:$0xff] %vm44, %v747
  %s750 = scalar_lea.vmem [#allocation4], 56
  %751 = vst.msk [vmem:[%s750] sm:$0xff] %vm44, %v747
  %v752 = vld [vmem:[#allocation4] sm:$0xff]
  %v753 = vld [vmem:[#allocation4 + $0x8] sm:$0xff]
  %v754 = vld [vmem:[#allocation4 + $0x10] sm:$0xff]
  %v755 = vld [vmem:[#allocation4 + $0x18] sm:$0xff]
  %v756 = vld [vmem:[#allocation4 + $0x20] sm:$0xff]
  %v757 = vld [vmem:[#allocation4 + $0x28] sm:$0xff]
  %v758 = vld [vmem:[#allocation4 + $0x30] sm:$0xff]
  %v759 = vld [vmem:[#allocation4 + $0x38] sm:$0xff]
  %v760 = vpack.c.bf16 %v753, %v752
  %v761 = vpack.c.bf16 %v755, %v754
  %v762 = vpack.c.bf16 %v757, %v756
  %v763 = vpack.c.bf16 %v759, %v758
  %v764 = vld [vmem:[%s2] sm:$0xf]
  %v765 = vld [vmem:[%s2 + $0x4] sm:$0xf]
  %v766 = vld [vmem:[%s2 + $0x8] sm:$0xf]
  %v767 = vld [vmem:[%s2 + $0xc] sm:$0xf]
  %v768 = vld [vmem:[%s3] sm:$0x1]
  %v770 = vperm.slane %v768, 0
  %v776 = vunpack.c.l.b16 %v764
  %v777 = vunpack.c.l.b16 %v765
  %v778 = vunpack.c.l.b16 %v766
  %v779 = vunpack.c.l.b16 %v767
  %v780 = vpack.c.b16 %v777, %v776
  %v781 = vpack.c.b16 %v779, %v778
  %v785 = vsel %vm44, %v760, 0
  %v788 = vsel %vm44, %v761, 0
  %v791 = vsel %vm44, %v762, 0
  %v794 = vsel %vm44, %v763, 0
  %796 = vmatpush.bf16.msra.mxu0 0
  %797 = vmatpush.bf16.msra.mxu0 0
  %798 = vmatpush.bf16.msra.mxu0 0
  %799 = vmatpush.bf16.msra.mxu0 0
  %800 = vmatpush.bf16.msra.mxu0 0
  %801 = vmatpush.bf16.msra.mxu0 0
  %802 = vmatpush.bf16.msra.mxu0 %v781
  %803 = vmatpush.bf16.msra.mxu0 %v780
  %804 = vmatmul.bf16.gmra.mxu0 %v785
  %v805 = vpop.f32.mrf.mxu0
  %v806 = vadd.f32 %v770, %v805
  %v807 = vpop.f32.mrf.mxu0
  %v808 = vadd.f32 %v770, %v807
  %809 = vmatmul.bf16.gmra.mxu0 %v788
  %v810 = vpop.f32.mrf.mxu0
  %v811 = vadd.f32 %v770, %v810
  %v812 = vpop.f32.mrf.mxu0
  %v813 = vadd.f32 %v770, %v812
  %814 = vmatmul.bf16.gmra.mxu0 %v791
  %v815 = vpop.f32.mrf.mxu0
  %v816 = vadd.f32 %v770, %v815
  %v817 = vpop.f32.mrf.mxu0
  %v818 = vadd.f32 %v770, %v817
  %819 = vmatmul.bf16.gmra.mxu0 %v794
  %v820 = vpop.f32.mrf.mxu0
  %v821 = vadd.f32 %v770, %v820
  %v822 = vpop.f32.mrf.mxu0
  %v823 = vadd.f32 %v770, %v822
  %824 = vdwg.mxu0
  %825 = vst [vmem:[%s4] sm:$0xff] %v806
  %826 = vst [vmem:[%s4 + $0x8] sm:$0xff] %v808
  %827 = vst [vmem:[%s4 + $0x10] sm:$0xff] %v811
  %828 = vst [vmem:[%s4 + $0x18] sm:$0xff] %v813
  %829 = vst [vmem:[%s4 + $0x20] sm:$0xff] %v816
  %830 = vst [vmem:[%s4 + $0x28] sm:$0xff] %v818
  %831 = vst [vmem:[%s4 + $0x30] sm:$0xff] %v821
  %832 = vst [vmem:[%s4 + $0x38] sm:$0xff] %v823
  // Predicated region
  $region22: #{bert_2dcnn_lstm_forward.3} parent=0 // pred_check
    _
  $region23: #{bert_2dcnn_lstm_forward.3} parent=0 // pred_check_branch
    %834 = sbr.rel (0) target = $region25
  $region24: #{bert_2dcnn_lstm_forward.3} parent=0 // pred_region
    _
  $region25: #{bert_2dcnn_lstm_forward.3} parent=0 // pred_fallthru
    _
  // Predicated region
  $region26: #{bert_2dcnn_lstm_forward.3} parent=0 // pred_check
    _
  $region27: #{bert_2dcnn_lstm_forward.3} parent=0 // pred_check_branch
    %836 = sbr.rel (0) target = $region29
  $region28: #{bert_2dcnn_lstm_forward.3} parent=0 // pred_region
    _
  $region29: #{bert_2dcnn_lstm_forward.3} parent=0 // pred_fallthru
    _

</llo_original>
